<compile_context>
chip_gen: v5e
topology: v5e:2x2
jax: 0.10.0
libtpu: 0.0.40
codegen_flags: <defaults>
</compile_context>

<pallas_src>
import functools

import jax
import jax.numpy as jnp
from jax.experimental import pallas as pl
from jax.experimental.pallas import tpu as pltpu

EPS = 1e-5
LANE = 128      # pad D / H / O to multiples of this (lane width)
SUBLANE = 16    # batch tile multiple (bf16 sublane packing)


def _round_up(v, m):
    return (v + m - 1) // m * m


def _pad_to(arr, shape):
    pads = [(0, s - d) for d, s in zip(arr.shape, shape)]
    if all(p == (0, 0) for p in pads):
        return arr
    return jnp.pad(arr, pads)


def _vmem_limit_bytes():
    """Generation-aware VMEM limit: ~100 MiB on 128 MiB chips (v5e/v6e),
    ~48 MiB on 64 MiB chips (v7x).  Falls back to the conservative value."""
    cap = 64 * 1024 * 1024
    try:
        info = pltpu.get_tpu_info()
        cap = int(getattr(info, "vmem_capacity_bytes", cap))
    except Exception:
        pass
    return max(min(cap - 16 * 1024 * 1024, 100 * 1024 * 1024), 32 * 1024 * 1024)


def _pick_tile_n(n, requested, *, min_tiles=1):
    """Batch tile: multiple of 16, clamped to the (rounded-up) batch.  With
    min_tiles=2 we keep at least two grid tiles when the batch allows it so the
    'parallel' axis can be sharded across both v7x TensorCores."""
    n16 = _round_up(n, SUBLANE)
    t = min(_round_up(max(requested, SUBLANE), SUBLANE), n16)
    if min_tiles > 1 and n16 >= min_tiles * SUBLANE:
        t = min(t, _round_up(pl.cdiv(n16, min_tiles), SUBLANE))
    return t


def _fused_fits(n_pad, t, dp, hp, op, x_bytes, out_bytes, vmem_limit):
    h_scr = n_pad * hp * 4                               # f32 hidden resident in VMEM
    weights = dp * hp * 2 + hp * op * 2                  # bf16, single-buffered
    streams = 2 * t * dp * x_bytes + 2 * t * op * out_bytes
    small = 6 * hp * 4 + op * 4
    return (h_scr + weights + streams + small) <= int(vmem_limit * 0.8)


def prepare_params(w1, gamma, beta, w2, b2):
    """One-time parameter prep: transpose, pad to lane multiples, cast MXU
    operands to bf16, merge gamma/beta.  Do this at parameter-creation time,
    NOT per forward call."""
    h_dim, d_dim = w1.shape
    o_dim = w2.shape[0]
    assert w2.shape[1] == h_dim and gamma.shape == (h_dim,) and beta.shape == (h_dim,)
    assert b2.shape == (o_dim,)
    dp = _round_up(d_dim, LANE)
    hp = _round_up(h_dim, LANE)
    op = _round_up(o_dim, LANE)
    gb = jnp.stack([gamma.astype(jnp.float32), beta.astype(jnp.float32)], axis=0)
    return {
        "w1t": _pad_to(w1.T.astype(jnp.bfloat16), (dp, hp)),   # (D, H) bf16
        "w2t": _pad_to(w2.T.astype(jnp.bfloat16), (hp, op)),   # (H, O) bf16
        "gb": _pad_to(gb, (2, hp)),                            # [gamma; beta] f32
        "b2": _pad_to(b2.astype(jnp.float32), (op,)).reshape(1, op),
        "dims": (d_dim, h_dim, o_dim),                         # static metadata
    }


# --------------------------------------------------------------------------
# Fully-fused single-kernel path: h resident in VMEM, 2-phase grid.
# --------------------------------------------------------------------------
def _fused_mlp_kernel(x_ref, w1t_ref, gb_ref, w2t_ref, b2_ref, o_ref,
                      h_scr, stats_scr, ss_scr, *, inv_n, eps):
    phase = pl.program_id(0)
    i = pl.program_id(1)

    @pl.when(phase == 0)
    def _phase0():
        # Linear 1 (no bias): bf16 MXU operands, f32 accumulation.  Cast is a
        # no-op if the caller already supplies bf16 x.
        x = x_ref[...].astype(jnp.bfloat16)
        h = jnp.dot(x, w1t_ref[...], preferred_element_type=jnp.float32)
        h_scr[i] = h                                  # stays in VMEM (no HBM roundtrip)

        @pl.when(i == 0)
        def _():
            stats_scr[...] = jnp.zeros_like(stats_scr)

        # Full-batch BatchNorm partial statistics, single traversal, f32.
        stats_scr[...] += jnp.concatenate(
            [jnp.sum(h, axis=0, keepdims=True),
             jnp.sum(h * h, axis=0, keepdims=True)], axis=0)

    @pl.when(phase == 1)
    def _phase1():
        @pl.when(i == 0)
        def _():
            # Fold full-batch stats into per-channel scale/shift (rsqrt on EUP).
            # Biased variance + eps placement match PyTorch training-mode BN.
            mean = stats_scr[0:1, :] * inv_n
            var = jnp.maximum(stats_scr[1:2, :] * inv_n - mean * mean, 0.0)
            scale = gb_ref[0:1, :] * jax.lax.rsqrt(var + eps)
            shift = gb_ref[1:2, :] - mean * scale
            ss_scr[...] = jnp.concatenate([scale, shift], axis=0)

        a = jnp.maximum(h_scr[i] * ss_scr[0:1, :] + ss_scr[1:2, :], 0.0)
        out = jnp.dot(a.astype(jnp.bfloat16), w2t_ref[...],
                      preferred_element_type=jnp.float32)
        o_ref[...] = (out + b2_ref[...]).astype(o_ref.dtype)


# --------------------------------------------------------------------------
# Streaming two-kernel fallback (h does not fit VMEM).
# --------------------------------------------------------------------------
def _stage1_kernel(x_ref, w1t_ref, h_ref, stats_ref):
    x = x_ref[...].astype(jnp.bfloat16)
    h = jnp.dot(x, w1t_ref[...], preferred_element_type=jnp.float32)
    h_ref[...] = h.astype(h_ref.dtype)
    stats_ref[...] = jnp.concatenate(
        [jnp.sum(h, axis=0, keepdims=True),
         jnp.sum(h * h, axis=0, keepdims=True)], axis=0)[None]


def _stage2_kernel(h_ref, stats_ref, gb_ref, w2t_ref, b2_ref, o_ref, *, inv_n, eps):
    # Recompute scale/shift per tile from the tiny stats tensor: keeps the batch
    # axis 'parallel' (no per-core scratch-init hazard under megacore) and is
    # free filler under the MXU.
    s = jnp.sum(stats_ref[...], axis=0)                      # (2, hp)
    mean = s[0:1, :] * inv_n
    var = jnp.maximum(s[1:2, :] * inv_n - mean * mean, 0.0)
    scale = gb_ref[0:1, :] * jax.lax.rsqrt(var + eps)
    shift = gb_ref[1:2, :] - mean * scale
    a = jnp.maximum(h_ref[...].astype(jnp.float32) * scale + shift, 0.0)
    out = jnp.dot(a.astype(jnp.bfloat16), w2t_ref[...],
                  preferred_element_type=jnp.float32)
    o_ref[...] = (out + b2_ref[...]).astype(o_ref.dtype)


def mlp_forward(x, params, *, tile_n=256, mode="auto", out_dtype=None):
    """x: (N, input_dim) (f32 or bf16); params from prepare_params().
    Returns (N, output_dim) in out_dtype (default x.dtype)."""
    n, d = x.shape
    d_dim, h_dim, o_dim = params["dims"]
    assert d == d_dim, f"expected input_dim={d_dim}, got {d}"
    if mode not in ("auto", "fused", "split"):
        raise ValueError(f"bad mode: {mode}")
    w1t, w2t, gb, b2 = params["w1t"], params["w2t"], params["gb"], params["b2"]
    dp, hp = w1t.shape
    op = w2t.shape[1]
    out_dtype = x.dtype if out_dtype is None else out_dtype
    x_bytes = jnp.dtype(x.dtype).itemsize
    out_bytes = jnp.dtype(out_dtype).itemsize
    vmem_limit = _vmem_limit_bytes()
    inv_n = 1.0 / float(n)   # TRUE batch size: padded rows are zero -> don't perturb sums

    # TODO(synk): running_mean/running_var buffer updates (a training-time side
    # effect of nn.BatchNorm1d) are not materialized; the forward output itself
    # uses batch statistics exactly as in training mode.

    use_fused = (mode == "fused")
    if mode == "auto":
        t_try = _pick_tile_n(n, tile_n, min_tiles=1)
        n_pad_try = _round_up(_round_up(n, SUBLANE), t_try)
        use_fused = _fused_fits(n_pad_try, t_try, dp, hp, op, x_bytes, out_bytes,
                                vmem_limit)

    t = _pick_tile_n(n, tile_n, min_tiles=1 if use_fused else 2)
    n_pad = _round_up(_round_up(n, SUBLANE), t)
    n_tiles = n_pad // t
    x_p = _pad_to(x, (n_pad, dp))

    if use_fused:
        kernel = functools.partial(_fused_mlp_kernel, inv_n=inv_n, eps=EPS)
        out_p = pl.pallas_call(
            kernel,
            out_shape=jax.ShapeDtypeStruct((n_pad, op), out_dtype),
            grid=(2, n_tiles),
            in_specs=[
                # x tiles stream in phase 0 only (stick at block 0 in phase 1).
                pl.BlockSpec((t, dp), lambda p, i: (i * (1 - p), 0)),
                pl.BlockSpec(memory_space=pltpu.MemorySpace.VMEM),   # w1t resident
                pl.BlockSpec(memory_space=pltpu.MemorySpace.VMEM),   # gamma/beta
                pl.BlockSpec(memory_space=pltpu.MemorySpace.VMEM),   # w2t resident
                pl.BlockSpec(memory_space=pltpu.MemorySpace.VMEM),   # b2
            ],
            # Output is written in phase 1 only; keep it parked on block 0 during
            # phase 0 so no garbage tiles are flushed to HBM.
            out_specs=pl.BlockSpec((t, op), lambda p, i: (i * p, 0)),
            scratch_shapes=[
                pltpu.VMEM((n_tiles, t, hp), jnp.float32),   # h resident (f32)
                pltpu.VMEM((2, hp), jnp.float32),            # [sum; sumsq]
                pltpu.VMEM((2, hp), jnp.float32),            # [scale; shift]
            ],
            compiler_params=pltpu.CompilerParams(
                # Phase axis is a dependency; batch stats need all tiles -> sequential.
                dimension_semantics=("arbitrary", "arbitrary"),
                vmem_limit_bytes=vmem_limit,
            ),
            cost_estimate=pl.CostEstimate(
                flops=2 * n_pad * hp * (dp + op) + 6 * n_pad * hp,
                transcendentals=0,
                bytes_accessed=n_pad * dp * x_bytes + n_pad * op * out_bytes
                + dp * hp * 2 + hp * op * 2 + (6 * hp + op) * 4,
            ),
        )(x_p, w1t, gb, w2t, b2)
        return out_p[:n, :o_dim]

    # ---- streaming fallback: stage 1 (x @ W1t + per-tile BN partial stats) ----
    h_buf, stats = pl.pallas_call(
        _stage1_kernel,
        out_shape=(
            jax.ShapeDtypeStruct((n_pad, hp), jnp.bfloat16),
            jax.ShapeDtypeStruct((n_tiles, 2, hp), jnp.float32),
        ),
        grid=(n_tiles,),
        in_specs=[
            pl.BlockSpec((t, dp), lambda i: (i, 0)),
            pl.BlockSpec(memory_space=pltpu.MemorySpace.VMEM),       # w1t resident
        ],
        out_specs=(
            pl.BlockSpec((t, hp), lambda i: (i, 0)),
            pl.BlockSpec((1, 2, hp), lambda i: (i, 0, 0)),
        ),
        compiler_params=pltpu.CompilerParams(
            dimension_semantics=("parallel",),
            vmem_limit_bytes=vmem_limit,
        ),
        cost_estimate=pl.CostEstimate(
            flops=2 * n_pad * dp * hp + 3 * n_pad * hp,
            transcendentals=0,
            bytes_accessed=n_pad * dp * x_bytes + dp * hp * 2
            + n_pad * hp * 2 + n_tiles * 2 * hp * 4,
        ),
    )(x_p, w1t)

    # ---- stage 2: BN (stats folded in-kernel) + ReLU + @W2t + b2 ----
    kernel2 = functools.partial(_stage2_kernel, inv_n=inv_n, eps=EPS)
    out_p = pl.pallas_call(
        kernel2,
        out_shape=jax.ShapeDtypeStruct((n_pad, op), out_dtype),
        grid=(n_tiles,),
        in_specs=[
            pl.BlockSpec((t, hp), lambda i: (i, 0)),
            pl.BlockSpec(memory_space=pltpu.MemorySpace.VMEM),       # stats (tiny)
            pl.BlockSpec(memory_space=pltpu.MemorySpace.VMEM),       # gamma/beta
            pl.BlockSpec(memory_space=pltpu.MemorySpace.VMEM),       # w2t resident
            pl.BlockSpec(memory_space=pltpu.MemorySpace.VMEM),       # b2
        ],
        out_specs=pl.BlockSpec((t, op), lambda i: (i, 0)),           # lane-dense store
        compiler_params=pltpu.CompilerParams(
            dimension_semantics=("parallel",),
            vmem_limit_bytes=vmem_limit,
        ),
        cost_estimate=pl.CostEstimate(
            flops=2 * n_pad * hp * op + 6 * n_pad * hp,
            transcendentals=0,
            bytes_accessed=n_pad * hp * 2 + n_tiles * 2 * hp * 4 + 2 * hp * 4
            + hp * op * 2 + op * 4 + n_pad * op * out_bytes,
        ),
    )(h_buf, stats, gb, w2t, b2)
    return out_p[:n, :o_dim]


if __name__ == "__main__":
    def ref_forward(x, w1, gamma, beta, w2, b2):
        # Pure-JAX reference with matching numerics: bf16 MXU operands,
        # f32 accumulation and f32 BatchNorm math (biased variance).
        h = jnp.dot(x.astype(jnp.bfloat16), w1.T.astype(jnp.bfloat16),
                    preferred_element_type=jnp.float32)
        mean = jnp.mean(h, axis=0, keepdims=True)
        var = jnp.mean((h - mean) ** 2, axis=0, keepdims=True)
        hn = (h - mean) * jax.lax.rsqrt(var + EPS) * gamma + beta
        a = jnp.maximum(hn, 0.0)
        return jnp.dot(a.astype(jnp.bfloat16), w2.T.astype(jnp.bfloat16),
                       preferred_element_type=jnp.float32) + b2

    key = jax.random.PRNGKey(0)

    def run_case(n, d, h_dim, o_dim, *, tile_n=256, mode="auto"):
        ks = jax.random.split(jax.random.fold_in(key, n * 7919 + d), 6)
        x = jax.random.normal(ks[0], (n, d), jnp.float32)
        w1 = jax.random.normal(ks[1], (h_dim, d), jnp.float32) / (d ** 0.5)
        gamma = 1.0 + 0.1 * jax.random.normal(ks[2], (h_dim,), jnp.float32)
        beta = 0.1 * jax.random.normal(ks[3], (h_dim,), jnp.float32)
        w2 = jax.random.normal(ks[4], (o_dim, h_dim), jnp.float32) / (h_dim ** 0.5)
        b2 = 0.1 * jax.random.normal(ks[5], (o_dim,), jnp.float32)

        params = prepare_params(w1, gamma, beta, w2, b2)   # one-time prep
        out = jax.block_until_ready(mlp_forward(x, params, tile_n=tile_n, mode=mode))
        ref = ref_forward(x, w1, gamma, beta, w2, b2)
        assert out.shape == (n, o_dim)
        err = jnp.max(jnp.abs(out - ref))
        assert jnp.allclose(out, ref, atol=2e-2, rtol=2e-2), \
            f"mismatch (mode={mode}), max abs err={err}"

    # Module defaults (512 -> 512 -> 128), small batch, fused path with multiple
    # batch tiles (exercises the 2-phase full-batch stats accumulation).
    run_case(64, 512, 512, 128, tile_n=32)
    # Small unaligned dims: exercises zero-padding (D/H/O -> 128, N -> 16) + slicing.
    run_case(10, 96, 72, 40)
    # Force the streaming two-kernel fallback (path used when h does not fit VMEM).
    run_case(48, 512, 512, 128, mode="split")

    print("KERNEL_OK")
</pallas_src>

<mosaic_0001>
module attributes {stable_mosaic.version = 11 : i64} {
  func.func @_fused_mlp_kernel(%arg0: i32, %arg1: i32, %arg2: memref<32x512xf32, #tpu.memory_space<vmem>>, %arg3: memref<512x512xbf16, #tpu.memory_space<vmem>>, %arg4: memref<2x512xf32, #tpu.memory_space<vmem>>, %arg5: memref<512x128xbf16, #tpu.memory_space<vmem>>, %arg6: memref<1x128xf32, #tpu.memory_space<vmem>>, %arg7: memref<32x128xf32, #tpu.memory_space<vmem>>, %arg8: memref<2x32x512xf32, #tpu.memory_space<vmem>>, %arg9: memref<2x512xf32, #tpu.memory_space<vmem>>, %arg10: memref<2x512xf32, #tpu.memory_space<vmem>>) attributes {dimension_semantics = [#tpu.dimension_semantics<arbitrary>, #tpu.dimension_semantics<arbitrary>], iteration_bounds = array<i64: 2, 2>, scalar_prefetch = 0 : i64, scratch_operands = 3 : i64, tpu.core_type = #tpu.core_type<tc>, window_params = [{transform_indices = @transform_0, window_bounds = array<i64: 32, 512>}, {pipeline_mode = #tpu.pipeline_mode<synchronous>, transform_indices = @transform_1, window_bounds = array<i64: 512, 512>}, {pipeline_mode = #tpu.pipeline_mode<synchronous>, transform_indices = @transform_2, window_bounds = array<i64: 2, 512>}, {pipeline_mode = #tpu.pipeline_mode<synchronous>, transform_indices = @transform_3, window_bounds = array<i64: 512, 128>}, {pipeline_mode = #tpu.pipeline_mode<synchronous>, transform_indices = @transform_4, window_bounds = array<i64: 1, 128>}, {transform_indices = @transform_5, window_bounds = array<i64: 32, 128>}]} {
    %c0_i32 = arith.constant 0 : i32
    %0 = arith.cmpi eq, %arg0, %c0_i32 : i32
    %1 = arith.extui %0 : i1 to i32
    %c0_i32_0 = arith.constant 0 : i32
    %2 = arith.cmpi ne, %1, %c0_i32_0 : i32
    scf.if %2 {
      %c0 = arith.constant 0 : index
      %c0_2 = arith.constant 0 : index
      %6 = vector.load %arg2[%c0, %c0_2] : memref<32x512xf32, #tpu.memory_space<vmem>>, vector<32x512xf32>
      %7 = arith.truncf %6 : vector<32x512xf32> to vector<32x512xbf16>
      %c0_3 = arith.constant 0 : index
      %c0_4 = arith.constant 0 : index
      %8 = vector.load %arg3[%c0_3, %c0_4] : memref<512x512xbf16, #tpu.memory_space<vmem>>, vector<512x512xbf16>
      %cst = arith.constant dense<0.000000e+00> : vector<32x512xf32>
      %9 = tpu.matmul %7, %8, %cst {dimension_numbers = #tpu.dot_dimension_numbers<[1], [0], [0], [1], [0, 0, 1, 1], [], []>} : vector<32x512xbf16>, vector<512x512xbf16>, vector<32x512xf32> -> vector<32x512xf32>
      %10 = arith.index_cast %arg1 : i32 to index
      %c0_5 = arith.constant 0 : index
      %c0_6 = arith.constant 0 : index
      %11 = vector.load %arg8[%10, %c0_5, %c0_6] : memref<2x32x512xf32, #tpu.memory_space<vmem>>, vector<1x32x512xf32>
      %12 = vector.shape_cast %11 : vector<1x32x512xf32> to vector<32x512xf32>
      %13 = vector.shape_cast %9 : vector<32x512xf32> to vector<1x32x512xf32>
      tpu.vector_store %arg8[%10, %c0_5, %c0_6], %13 {strides = array<i32>} : memref<2x32x512xf32, #tpu.memory_space<vmem>>, vector<1x32x512xf32>,
      %c0_i32_7 = arith.constant 0 : i32
      %14 = arith.cmpi eq, %arg1, %c0_i32_7 : i32
      %15 = arith.extui %14 : i1 to i32
      %c0_i32_8 = arith.constant 0 : i32
      %16 = arith.cmpi ne, %15, %c0_i32_8 : i32
      scf.if %16 {
        %cst_15 = arith.constant 0.000000e+00 : f32
        %26 = vector.broadcast %cst_15 : f32 to vector<2x512xf32>
        %c0_16 = arith.constant 0 : index
        %c0_17 = arith.constant 0 : index
        %27 = vector.load %arg9[%c0_16, %c0_17] : memref<2x512xf32, #tpu.memory_space<vmem>>, vector<2x512xf32>
        tpu.vector_store %arg9[%c0_16, %c0_17], %26 {strides = array<i32>} : memref<2x512xf32, #tpu.memory_space<vmem>>, vector<2x512xf32>,
      } else {
      }
      %c0_9 = arith.constant 0 : index
      %c0_10 = arith.constant 0 : index
      %17 = vector.load %arg9[%c0_9, %c0_10] : memref<2x512xf32, #tpu.memory_space<vmem>>, vector<2x512xf32>
      %cst_11 = arith.constant dense<0.000000e+00> : vector<512xf32>
      %18 = vector.multi_reduction <add>, %9, %cst_11 [0] : vector<32x512xf32> to vector<512xf32>
      %19 = vector.shape_cast %18 : vector<512xf32> to vector<1x512xf32>
      %20 = arith.mulf %9, %9 : vector<32x512xf32>
      %cst_12 = arith.constant dense<0.000000e+00> : vector<512xf32>
      %21 = vector.multi_reduction <add>, %20, %cst_12 [0] : vector<32x512xf32> to vector<512xf32>
      %22 = vector.shape_cast %21 : vector<512xf32> to vector<1x512xf32>
      %23 = tpu.concatenate %19, %22 in 0 : vector<1x512xf32>, vector<1x512xf32> -> vector<2x512xf32>
      %24 = arith.addf %17, %23 : vector<2x512xf32>
      %c0_13 = arith.constant 0 : index
      %c0_14 = arith.constant 0 : index
      %25 = vector.load %arg9[%c0_13, %c0_14] : memref<2x512xf32, #tpu.memory_space<vmem>>, vector<2x512xf32>
      tpu.vector_store %arg9[%c0_13, %c0_14], %24 {strides = array<i32>} : memref<2x512xf32, #tpu.memory_space<vmem>>, vector<2x512xf32>,
    } else {
    }
    %c1_i32 = arith.constant 1 : i32
    %3 = arith.cmpi eq, %arg0, %c1_i32 : i32
    %4 = arith.extui %3 : i1 to i32
    %c0_i32_1 = arith.constant 0 : i32
    %5 = arith.cmpi ne, %4, %c0_i32_1 : i32
    scf.if %5 {
      %c0_i32_2 = arith.constant 0 : i32
      %6 = arith.cmpi eq, %arg1, %c0_i32_2 : i32
      %7 = arith.extui %6 : i1 to i32
      %c0_i32_3 = arith.constant 0 : i32
      %8 = arith.cmpi ne, %7, %c0_i32_3 : i32
      scf.if %8 {
        %c0_15 = arith.constant 0 : index
        %c0_16 = arith.constant 0 : index
        %27 = vector.load %arg9[%c0_15, %c0_16] : memref<2x512xf32, #tpu.memory_space<vmem>>, vector<1x512xf32>
        %cst_17 = arith.constant 1.562500e-02 : f32
        %28 = vector.broadcast %cst_17 : f32 to vector<1x512xf32>
        %29 = arith.mulf %27, %28 : vector<1x512xf32>
        %c1_18 = arith.constant 1 : index
        %c0_19 = arith.constant 0 : index
        %30 = vector.load %arg9[%c1_18, %c0_19] : memref<2x512xf32, #tpu.memory_space<vmem>>, vector<1x512xf32>
        %cst_20 = arith.constant 1.562500e-02 : f32
        %31 = vector.broadcast %cst_20 : f32 to vector<1x512xf32>
        %32 = arith.mulf %30, %31 : vector<1x512xf32>
        %33 = arith.mulf %29, %29 : vector<1x512xf32>
        %34 = arith.subf %32, %33 : vector<1x512xf32>
        %cst_21 = arith.constant 0.000000e+00 : f32
        %35 = vector.broadcast %cst_21 : f32 to vector<1x512xf32>
        %36 = arith.maximumf %34, %35 : vector<1x512xf32>
        %c0_22 = arith.constant 0 : index
        %c0_23 = arith.constant 0 : index
        %37 = vector.load %arg4[%c0_22, %c0_23] : memref<2x512xf32, #tpu.memory_space<vmem>>, vector<1x512xf32>
        %cst_24 = arith.constant 9.99999974E-6 : f32
        %38 = vector.broadcast %cst_24 : f32 to vector<1x512xf32>
        %39 = arith.addf %36, %38 : vector<1x512xf32>
        %40 = math.rsqrt %39 : vector<1x512xf32>
        %41 = arith.mulf %37, %40 : vector<1x512xf32>
        %c1_25 = arith.constant 1 : index
        %c0_26 = arith.constant 0 : index
        %42 = vector.load %arg4[%c1_25, %c0_26] : memref<2x512xf32, #tpu.memory_space<vmem>>, vector<1x512xf32>
        %43 = arith.mulf %29, %41 : vector<1x512xf32>
        %44 = arith.subf %42, %43 : vector<1x512xf32>
        %45 = tpu.concatenate %41, %44 in 0 : vector<1x512xf32>, vector<1x512xf32> -> vector<2x512xf32>
        %c0_27 = arith.constant 0 : index
        %c0_28 = arith.constant 0 : index
        %46 = vector.load %arg10[%c0_27, %c0_28] : memref<2x512xf32, #tpu.memory_space<vmem>>, vector<2x512xf32>
        tpu.vector_store %arg10[%c0_27, %c0_28], %45 {strides = array<i32>} : memref<2x512xf32, #tpu.memory_space<vmem>>, vector<2x512xf32>,
      } else {
      }
      %9 = arith.index_cast %arg1 : i32 to index
      %c0 = arith.constant 0 : index
      %c0_4 = arith.constant 0 : index
      %10 = vector.load %arg8[%9, %c0, %c0_4] : memref<2x32x512xf32, #tpu.memory_space<vmem>>, vector<1x32x512xf32>
      %11 = vector.shape_cast %10 : vector<1x32x512xf32> to vector<32x512xf32>
      %c0_5 = arith.constant 0 : index
      %c0_6 = arith.constant 0 : index
      %12 = vector.load %arg10[%c0_5, %c0_6] : memref<2x512xf32, #tpu.memory_space<vmem>>, vector<1x512xf32>
      %13 = vector.broadcast %12 : vector<1x512xf32> to vector<32x512xf32>
      %14 = arith.mulf %11, %13 : vector<32x512xf32>
      %c1 = arith.constant 1 : index
      %c0_7 = arith.constant 0 : index
      %15 = vector.load %arg10[%c1, %c0_7] : memref<2x512xf32, #tpu.memory_space<vmem>>, vector<1x512xf32>
      %16 = vector.broadcast %15 : vector<1x512xf32> to vector<32x512xf32>
      %17 = arith.addf %14, %16 : vector<32x512xf32>
      %cst = arith.constant 0.000000e+00 : f32
      %18 = vector.broadcast %cst : f32 to vector<32x512xf32>
      %19 = arith.maximumf %17, %18 : vector<32x512xf32>
      %20 = arith.truncf %19 : vector<32x512xf32> to vector<32x512xbf16>
      %c0_8 = arith.constant 0 : index
      %c0_9 = arith.constant 0 : index
      %21 = vector.load %arg5[%c0_8, %c0_9] : memref<512x128xbf16, #tpu.memory_space<vmem>>, vector<512x128xbf16>
      %cst_10 = arith.constant dense<0.000000e+00> : vector<32x128xf32>
      %22 = tpu.matmul %20, %21, %cst_10 {dimension_numbers = #tpu.dot_dimension_numbers<[1], [0], [0], [1], [0, 0, 1, 1], [], []>} : vector<32x512xbf16>, vector<512x128xbf16>, vector<32x128xf32> -> vector<32x128xf32>
      %c0_11 = arith.constant 0 : index
      %c0_12 = arith.constant 0 : index
      %23 = vector.load %arg6[%c0_11, %c0_12] : memref<1x128xf32, #tpu.memory_space<vmem>>, vector<1x128xf32>
      %24 = vector.broadcast %23 : vector<1x128xf32> to vector<32x128xf32>
      %25 = arith.addf %22, %24 : vector<32x128xf32>
      %c0_13 = arith.constant 0 : index
      %c0_14 = arith.constant 0 : index
      %26 = vector.load %arg7[%c0_13, %c0_14] : memref<32x128xf32, #tpu.memory_space<vmem>>, vector<32x128xf32>
      tpu.vector_store %arg7[%c0_13, %c0_14], %25 {strides = array<i32>} : memref<32x128xf32, #tpu.memory_space<vmem>>, vector<32x128xf32>,
    } else {
    }
    return
  }
  func.func @transform_0(%arg0: i32, %arg1: i32) -> (i32, i32) {
    %c1_i32 = arith.constant 1 : i32
    %0 = arith.subi %c1_i32, %arg0 : i32
    %1 = arith.muli %arg1, %0 : i32
    %c0_i32 = arith.constant 0 : i32
    %c0_i32_0 = arith.constant 0 : i32
    return %1, %c0_i32 : i32, i32
  }
  func.func @transform_1(%arg0: i32, %arg1: i32) -> (i32, i32) {
    %c0_i32 = arith.constant 0 : i32
    %c0_i32_0 = arith.constant 0 : i32
    %c0_i32_1 = arith.constant 0 : i32
    return %c0_i32, %c0_i32_0 : i32, i32
  }
  func.func @transform_2(%arg0: i32, %arg1: i32) -> (i32, i32) {
    %c0_i32 = arith.constant 0 : i32
    %c0_i32_0 = arith.constant 0 : i32
    %c0_i32_1 = arith.constant 0 : i32
    return %c0_i32, %c0_i32_0 : i32, i32
  }
  func.func @transform_3(%arg0: i32, %arg1: i32) -> (i32, i32) {
    %c0_i32 = arith.constant 0 : i32
    %c0_i32_0 = arith.constant 0 : i32
    %c0_i32_1 = arith.constant 0 : i32
    return %c0_i32, %c0_i32_0 : i32, i32
  }
  func.func @transform_4(%arg0: i32, %arg1: i32) -> (i32, i32) {
    %c0_i32 = arith.constant 0 : i32
    %c0_i32_0 = arith.constant 0 : i32
    %c0_i32_1 = arith.constant 0 : i32
    return %c0_i32, %c0_i32_0 : i32, i32
  }
  func.func @transform_5(%arg0: i32, %arg1: i32) -> (i32, i32) {
    %0 = arith.muli %arg1, %arg0 : i32
    %c0_i32 = arith.constant 0 : i32
    %c0_i32_0 = arith.constant 0 : i32
    return %0, %c0_i32 : i32, i32
  }
}

</mosaic_0001>

<llo_original>
// kernel: tpu_custom_call.1
$region0: #{tpu_custom_call.1}
  #allocation0 [shape = 'u32[]', space=smem, size = 0x4, offset = 0x4, fixed_abs, tag = 'smem constant byte address 0x4 - core index']
  #allocation1 [shape = 'u32[72,128]{1,0:T(1,128)}', space=vmem, size = 0x9000, scoped, tag = 'internal scratch']
  #allocation2 [shape = 'f32[2,32,512]{2,1,0:T(8,128)}', space=vmem, size = 0x20000, scoped, tag = 'scratch operand']
  #allocation3 [shape = 'f32[2,512]{1,0:T(2,128)}', space=vmem, size = 0x1000, scoped, tag = 'scratch operand']
  #allocation4 [shape = 'f32[2,512]{1,0:T(2,128)}', space=vmem, size = 0x1000, scoped, tag = 'scratch operand']
  %s0 = inlined_call_operand.hbm [shape: f32[64,512], index: 0, kind: input, shape index: {}]
  %s1 = inlined_call_operand.hbm [shape: bf16[512,512], index: 1, kind: input, shape index: {}]
  %s2 = inlined_call_operand.hbm [shape: f32[2,512], index: 2, kind: input, shape index: {}]
  %s3 = inlined_call_operand.hbm [shape: bf16[512,128], index: 3, kind: input, shape index: {}]
  %s4 = inlined_call_operand.vmem [shape: f32[1,128], index: 4, kind: input, shape index: {}]
  %s5 = inlined_call_operand.hbm [shape: f32[64,128], index: 5, kind: output, shape index: {}]
  %s6 = sld [smem:[#allocation0]]
  $region85: #{tpu_custom_call.1} parent=0
    _
  %s8 = ssub.s32 1, %s6
  %s9 = scalar_select 0, %s8, %s6
  $region1: #{tpu_custom_call.1} parent=0
    #allocation5 [shape = 'u8[131072]{0}', space=vmem, size = 0x20000, scoped, tag = 'input window, operand 0']
    #allocation6 [shape = 's32[2]{0}', space=sflag, size = 0x8, scoped, tag = 'scoped memory for tpu_custom_call.1']
    #allocation7 [shape = 's32[2]{0}', space=sflag, size = 0x8, scoped, tag = 'scoped memory for tpu_custom_call.1']
    #allocation8 [shape = 'u8[524288]{0}', space=vmem, size = 0x80000, scoped, tag = 'input window, operand 1, single buffered']
    #allocation9 [shape = 's32[1]{0}', space=sflag, size = 0x4, scoped, tag = 'scoped memory for tpu_custom_call.1']
    #allocation10 [shape = 'u8[4096]{0}', space=vmem, size = 0x1000, scoped, tag = 'input window, operand 2, single buffered']
    #allocation11 [shape = 'u8[131072]{0}', space=vmem, size = 0x20000, scoped, tag = 'input window, operand 3, single buffered']
    #allocation12 [shape = 's32[1]{0}', space=sflag, size = 0x4, scoped, tag = 'scoped memory for tpu_custom_call.1']
    #allocation13 [shape = 'u8[32768]{0}', space=vmem, size = 0x8000, scoped, tag = 'output window, operand 0']
    %10 = vsyncpa [#allocation6], 0
    %s11 = scalar_lea.sflag [#allocation6], 1
    %12 = vsyncpa %s11, 0
    %13 = vsyncpa [#allocation9], 0
    %14 = vsyncpa [#allocation12], 0
    %15 = vsyncpa [#allocation7], 0
    %s16 = scalar_lea.sflag [#allocation7], 1
    %17 = vsyncpa %s16, 0
    loop: start=0, step=1, limit=6
    $region2: #{tpu_custom_call.1} parent=1 // loop_pre_header
      _
    $region3: #{tpu_custom_call.1} parent=1 // loop_header
      %s19 = sphi 0, %s23
      %p20 = scmp.ge.s32.totalorder %s19, 6
      %s26 = sphi 0, %s38
      %s27 = sphi 0, %s34
      %s28 = sphi 0, %s26
      %s29 = sphi 0, %s27
      %s30 = sphi 0, %s28
      %s31 = sphi 0, %s29
      %s45 = sphi 0, %s47
      %s48 = sphi 0, %s45
      %s49 = sphi 0, %s48
      %s65 = sphi 0, %s49
      %s69 = sphi 0, %s69
      %s71 = sphi 0, %s69
      %s72 = sphi 0, %s71
      %s86 = sphi 0, %s72
      %s90 = sphi 0, %s90
      %s92 = sphi 0, %s90
      %s93 = sphi 0, %s92
      %s107 = sphi 0, %s93
      %s111 = sphi 0, %s111
      %s113 = sphi 0, %s111
      %s114 = sphi 0, %s113
      %s128 = sphi 0, %s114
      %s132 = sphi 0, %s132
      %s134 = sphi 0, %s132
      %s135 = sphi 0, %s134
      %s149 = sphi 0, %s135
      %s157 = sphi 0, %s159
      %s160 = sphi 0, %s157
      %s161 = sphi 0, %s160
      %s177 = sphi 0, %s161
    $region4: #{tpu_custom_call.1} parent=1 // loop_header_branch
      %22 = sbr.rel (%p20) target = $region8
    $region5: #{tpu_custom_call.1} parent=1 // loop_body
      %s24 = ssub.s32 %s19, 1
      %s25 = ssub.s32 %s19, 2
      %s32 = sadd.s32 1, %s27
      %p33 = scmp.ge.s32.totalorder %s32, 2
      %s34 = scalar_select %p33, 0, %s32
      %s35 = sadd.s32 1, %s26
      %s36 = scalar_select %p33, %s35, %s26
      %p37 = scmp.ge.s32.totalorder %s36, 2
      %s38 = scalar_select %p37, 0, %s36
      %s39 = ssub.s32 1, %s26
      %s40 = smul.u32 %s27, %s39
      %s41 = ssub.s32 1, %s38
      %s42 = smul.u32 %s34, %s41
      %s43 = ssub.s32 %s40, %s42
      %p44 = scmp.eq.s32.totalorder %s43, 0
      %s46 = sadd.s32 %s45, 1
      %s47 = scalar_select %p44, %s45, %s46
      %p50 = pneg %p44
      %p51 = scmp.eq.s32.totalorder %s19, 3
      %p52 = por %p50, %p51
      %p53 = scmp.ne.s32.totalorder %s45, %s48
      %p54 = scmp.eq.s32.totalorder %s19, 0
      %p55 = por %p53, %p54
      %p56 = scmp.ne.s32.totalorder %s45, %s48
      %p57 = scmp.eq.s32.totalorder %s24, 3
      %p58 = por %p56, %p57
      %p59 = scmp.ne.s32.totalorder %s48, %s49
      %p60 = scmp.eq.s32.totalorder %s24, 0
      %p61 = por %p59, %p60
      %p62 = scmp.ne.s32.totalorder %s48, %s49
      %p63 = scmp.eq.s32.totalorder %s25, 3
      %p64 = por %p62, %p63
      %p66 = scmp.ne.s32.totalorder %s49, %s65
      %p67 = scmp.eq.s32.totalorder %s25, 0
      %p68 = por %p66, %p67
      %s70 = sadd.s32 %s69, 1
      %p73 = scmp.eq.s32.totalorder %s19, 3
      %p74 = scmp.ne.s32.totalorder %s69, %s71
      %p75 = scmp.eq.s32.totalorder %s19, 0
      %p76 = por %p74, %p75
      %p77 = scmp.ne.s32.totalorder %s69, %s71
      %p78 = scmp.eq.s32.totalorder %s24, 3
      %p79 = por %p77, %p78
      %p80 = scmp.ne.s32.totalorder %s71, %s72
      %p81 = scmp.eq.s32.totalorder %s24, 0
      %p82 = por %p80, %p81
      %p83 = scmp.ne.s32.totalorder %s71, %s72
      %p84 = scmp.eq.s32.totalorder %s25, 3
      %p85 = por %p83, %p84
      %p87 = scmp.ne.s32.totalorder %s72, %s86
      %p88 = scmp.eq.s32.totalorder %s25, 0
      %p89 = por %p87, %p88
      %s91 = sadd.s32 %s90, 1
      %p94 = scmp.eq.s32.totalorder %s19, 3
      %p95 = scmp.ne.s32.totalorder %s90, %s92
      %p96 = scmp.eq.s32.totalorder %s19, 0
      %p97 = por %p95, %p96
      %p98 = scmp.ne.s32.totalorder %s90, %s92
      %p99 = scmp.eq.s32.totalorder %s24, 3
      %p100 = por %p98, %p99
      %p101 = scmp.ne.s32.totalorder %s92, %s93
      %p102 = scmp.eq.s32.totalorder %s24, 0
      %p103 = por %p101, %p102
      %p104 = scmp.ne.s32.totalorder %s92, %s93
      %p105 = scmp.eq.s32.totalorder %s25, 3
      %p106 = por %p104, %p105
      %p108 = scmp.ne.s32.totalorder %s93, %s107
      %p109 = scmp.eq.s32.totalorder %s25, 0
      %p110 = por %p108, %p109
      %s112 = sadd.s32 %s111, 1
      %p115 = scmp.eq.s32.totalorder %s19, 3
      %p116 = scmp.ne.s32.totalorder %s111, %s113
      %p117 = scmp.eq.s32.totalorder %s19, 0
      %p118 = por %p116, %p117
      %p119 = scmp.ne.s32.totalorder %s111, %s113
      %p120 = scmp.eq.s32.totalorder %s24, 3
      %p121 = por %p119, %p120
      %p122 = scmp.ne.s32.totalorder %s113, %s114
      %p123 = scmp.eq.s32.totalorder %s24, 0
      %p124 = por %p122, %p123
      %p125 = scmp.ne.s32.totalorder %s113, %s114
      %p126 = scmp.eq.s32.totalorder %s25, 3
      %p127 = por %p125, %p126
      %p129 = scmp.ne.s32.totalorder %s114, %s128
      %p130 = scmp.eq.s32.totalorder %s25, 0
      %p131 = por %p129, %p130
      %s133 = sadd.s32 %s132, 1
      %p136 = scmp.eq.s32.totalorder %s19, 3
      %p137 = scmp.ne.s32.totalorder %s132, %s134
      %p138 = scmp.eq.s32.totalorder %s19, 0
      %p139 = por %p137, %p138
      %p140 = scmp.ne.s32.totalorder %s132, %s134
      %p141 = scmp.eq.s32.totalorder %s24, 3
      %p142 = por %p140, %p141
      %p143 = scmp.ne.s32.totalorder %s134, %s135
      %p144 = scmp.eq.s32.totalorder %s24, 0
      %p145 = por %p143, %p144
      %p146 = scmp.ne.s32.totalorder %s134, %s135
      %p147 = scmp.eq.s32.totalorder %s25, 3
      %p148 = por %p146, %p147
      %p150 = scmp.ne.s32.totalorder %s135, %s149
      %p151 = scmp.eq.s32.totalorder %s25, 0
      %p152 = por %p150, %p151
      %s153 = smul.u32 %s27, %s26
      %s154 = smul.u32 %s34, %s38
      %s155 = ssub.s32 %s153, %s154
      %p156 = scmp.eq.s32.totalorder %s155, 0
      %s158 = sadd.s32 %s157, 1
      %s159 = scalar_select %p156, %s157, %s158
      %p162 = pneg %p156
      %p163 = scmp.eq.s32.totalorder %s19, 3
      %p164 = por %p162, %p163
      %p165 = scmp.ne.s32.totalorder %s157, %s160
      %p166 = scmp.eq.s32.totalorder %s19, 0
      %p167 = por %p165, %p166
      %p168 = scmp.ne.s32.totalorder %s157, %s160
      %p169 = scmp.eq.s32.totalorder %s24, 3
      %p170 = por %p168, %p169
      %p171 = scmp.ne.s32.totalorder %s160, %s161
      %p172 = scmp.eq.s32.totalorder %s24, 0
      %p173 = por %p171, %p172
      %p174 = scmp.ne.s32.totalorder %s160, %s161
      %p175 = scmp.eq.s32.totalorder %s25, 3
      %p176 = por %p174, %p175
      %p178 = scmp.ne.s32.totalorder %s161, %s177
      %p179 = scmp.eq.s32.totalorder %s25, 0
      %p180 = por %p178, %p179
      %p181 = scmp.le.s32.totalorder 1, %s19
      %p182 = scmp.lt.s32.totalorder %s19, 5
      %p183 = pnand %p181, %p182
      %p184 = pneg %p183
      // Predicated region
      $region9: #{tpu_custom_call.1} parent=5 // pred_check
        _
      $region10: #{tpu_custom_call.1} parent=5 // pred_check_branch
        %186 = sbr.rel (%p183) target = $region12
      $region11: #{tpu_custom_call.1} parent=5 // pred_region
        %s187 = ssub.s32 %s19, 1
        // Predicated region
        $region13: #{tpu_custom_call.1} parent=11 // pred_check
          %p188 = pneg %p82
        $region14: #{tpu_custom_call.1} parent=11 // pred_check_branch
          %190 = sbr.rel (%p188) target = $region16
        $region15: #{tpu_custom_call.1} parent=11 // pred_region
          %192 = vsyncadd [#allocation9], 0
          %s193 = sshll.u32 %s1, 4
          %s194 = int_to_ptr.hbm [resolvable:$true] %s193
          %s195 = sshll.u32 [#allocation8], 4
          %s196 = int_to_ptr.vmem [resolvable:$true] %s195
          %201 = dma.hbm_to_vmem [thread:$0]  %s194, 16384, %s196, [#allocation9], 256, 256, 16
        $region16: #{tpu_custom_call.1} parent=11 // pred_fallthru
          _
        // Predicated region
        $region17: #{tpu_custom_call.1} parent=11 // pred_check
          %p202 = pneg %p103
        $region18: #{tpu_custom_call.1} parent=11 // pred_check_branch
          %204 = sbr.rel (%p202) target = $region20
        $region19: #{tpu_custom_call.1} parent=11 // pred_region
          %206 = vsyncadd [#allocation9], 0
          %s208 = sshll.u32 %s2, 4
          %s209 = int_to_ptr.hbm [resolvable:$true] %s208
          %s210 = sshll.u32 [#allocation10], 4
          %s211 = int_to_ptr.vmem [resolvable:$true] %s210
          %213 = dma.hbm_to_vmem [thread:$0]  %s209, 128, %s211, [#allocation9]
        $region20: #{tpu_custom_call.1} parent=11 // pred_fallthru
          _
        // Predicated region
        $region21: #{tpu_custom_call.1} parent=11 // pred_check
          %p214 = pneg %p124
        $region22: #{tpu_custom_call.1} parent=11 // pred_check_branch
          %216 = sbr.rel (%p214) target = $region24
        $region23: #{tpu_custom_call.1} parent=11 // pred_region
          %218 = vsyncadd [#allocation12], 0
          %s219 = sshll.u32 %s3, 4
          %s220 = int_to_ptr.hbm [resolvable:$true] %s219
          %s221 = sshll.u32 [#allocation11], 4
          %s222 = int_to_ptr.vmem [resolvable:$true] %s221
          %227 = dma.hbm_to_vmem [thread:$0]  %s220, 4096, %s222, [#allocation12], 64, 64, 4
        $region24: #{tpu_custom_call.1} parent=11 // pred_fallthru
          _
        // Predicated region
        $region25: #{tpu_custom_call.1} parent=11 // pred_check
          %p228 = pneg %p145
        $region26: #{tpu_custom_call.1} parent=11 // pred_check_branch
          %230 = sbr.rel (%p228) target = $region28
        $region27: #{tpu_custom_call.1} parent=11 // pred_region
          _
        $region28: #{tpu_custom_call.1} parent=11 // pred_fallthru
          _
      $region12: #{tpu_custom_call.1} parent=5 // pred_fallthru
        _
      %p231 = scmp.lt.s32.totalorder %s19, 4
      // Predicated region
      $region29: #{tpu_custom_call.1} parent=5 // pred_check
        %p232 = pneg %p231
      $region30: #{tpu_custom_call.1} parent=5 // pred_check_branch
        %234 = sbr.rel (%p232) target = $region32
      $region31: #{tpu_custom_call.1} parent=5 // pred_region
        // Predicated region
        $region33: #{tpu_custom_call.1} parent=31 // pred_check
          %p235 = pneg %p55
        $region34: #{tpu_custom_call.1} parent=31 // pred_check_branch
          %237 = sbr.rel (%p235) target = $region36
        $region35: #{tpu_custom_call.1} parent=31 // pred_region
          %s238 = sand.u32 %s45, 1
          %s239 = scalar_lea.sflag [#allocation6], %s238
          %s240 = sand.u32 %s45, 1
          %s241 = smul.addr %s240, 128
          %s242 = scalar_lea.vmem [#allocation5], %s241
          %s243 = ssub.s32 1, %s26
          %s244 = smul.u32 %s27, %s243
          %s245 = smul.u32 4, %s244
          %247 = vsyncadd %s239, 0
          %s248 = smul.addr %s245, 4
          %s249 = smul.addr %s248, 8
          %s250 = scalar_lea.hbm %s0, %s249
          %s251 = sshll.u32 %s250, 4
          %s252 = int_to_ptr.hbm [resolvable:$true] %s251
          %s253 = sshll.u32 %s242, 4
          %s254 = int_to_ptr.vmem [resolvable:$true] %s253
          %259 = dma.hbm_to_vmem [thread:$0]  %s252, 2048, %s254, %s239, 512, 512, 32
        $region36: #{tpu_custom_call.1} parent=31 // pred_fallthru
          _
      $region32: #{tpu_custom_call.1} parent=5 // pred_fallthru
        _
      %p260 = scmp.le.s32.totalorder 1, %s19
      %p261 = scmp.lt.s32.totalorder %s19, 5
      %p262 = pnand %p260, %p261
      %p263 = pneg %p262
      // Predicated region
      $region37: #{tpu_custom_call.1} parent=5 // pred_check
        _
      $region38: #{tpu_custom_call.1} parent=5 // pred_check_branch
        %265 = sbr.rel (%p262) target = $region40
      $region39: #{tpu_custom_call.1} parent=5 // pred_region
        %s266 = ssub.s32 %s19, 1
        %s267 = sand.u32 %s48, 1
        %s268 = scalar_lea.sflag [#allocation6], %s267
        %s269 = sand.u32 %s48, 1
        %s270 = smul.addr %s269, 128
        %s271 = scalar_lea.vmem [#allocation5], %s270
        // Predicated region
        $region41: #{tpu_custom_call.1} parent=39 // pred_check
          %p272 = pneg %p61
        $region42: #{tpu_custom_call.1} parent=39 // pred_check_branch
          %274 = sbr.rel (%p272) target = $region44
        $region43: #{tpu_custom_call.1} parent=39 // pred_region
          %276 = dma.done %s268, 2048
        $region44: #{tpu_custom_call.1} parent=39 // pred_fallthru
          _
        // Predicated region
        $region45: #{tpu_custom_call.1} parent=39 // pred_check
          %p277 = pneg %p82
        $region46: #{tpu_custom_call.1} parent=39 // pred_check_branch
          %279 = sbr.rel (%p277) target = $region48
        $region47: #{tpu_custom_call.1} parent=39 // pred_region
          %281 = dma.done [#allocation9], 16384
        $region48: #{tpu_custom_call.1} parent=39 // pred_fallthru
          _
        // Predicated region
        $region49: #{tpu_custom_call.1} parent=39 // pred_check
          %p282 = pneg %p103
        $region50: #{tpu_custom_call.1} parent=39 // pred_check_branch
          %284 = sbr.rel (%p282) target = $region52
        $region51: #{tpu_custom_call.1} parent=39 // pred_region
          %286 = dma.done [#allocation9], 128
        $region52: #{tpu_custom_call.1} parent=39 // pred_fallthru
          _
        // Predicated region
        $region53: #{tpu_custom_call.1} parent=39 // pred_check
          %p287 = pneg %p124
        $region54: #{tpu_custom_call.1} parent=39 // pred_check_branch
          %289 = sbr.rel (%p287) target = $region56
        $region55: #{tpu_custom_call.1} parent=39 // pred_region
          %291 = dma.done [#allocation12], 4096
        $region56: #{tpu_custom_call.1} parent=39 // pred_fallthru
          _
        %s292 = sand.u32 %s48, 1
        %s293 = scalar_lea.sflag [#allocation6], %s292
        %s294 = sand.u32 %s48, 1
        %s295 = smul.addr %s294, 128
        %s296 = scalar_lea.vmem [#allocation5], %s295
        %p297 = pneg %p61
        %p298 = pneg %p58
        %p299 = pneg %p82
        %p300 = pneg %p79
        %p301 = pneg %p103
        %p302 = pneg %p100
        %p303 = pneg %p124
        %p304 = pneg %p121
        %p305 = pneg %p145
        %p306 = pneg %p142
        %p307 = pneg %p173
        %p308 = pneg %p170
        %s309 = sand.u32 %s160, 1
        %s310 = scalar_lea.sflag [#allocation7], %s309
        %s311 = sand.u32 %s160, 1
        %s312 = smul.addr %s311, 32
        %s313 = scalar_lea.vmem [#allocation13], %s312
        %s314 = ssub.s32 1, %s28
        %s315 = smul.u32 %s29, %s314
        %s316 = smul.u32 4, %s315
        %s317 = smul.u32 %s29, %s28
        %s318 = smul.u32 4, %s317
        %p319 = scmp.eq.s32.totalorder %s28, 0
        // Predicated region
        $region57: #{tpu_custom_call.1} parent=39 // pred_check
          %p320 = pneg %p319
        $region58: #{tpu_custom_call.1} parent=39 // pred_check_branch
          %322 = sbr.rel (%p320) target = $region60
        $region59: #{tpu_custom_call.1} parent=39 // pred_region
          %v323 = vld [vmem:[%s271] sm:$0xff]
          %v324 = vld [vmem:[%s271 + $0x8] sm:$0xff]
          %v325 = vld [vmem:[%s271 + $0x10] sm:$0xff]
          %v326 = vld [vmem:[%s271 + $0x18] sm:$0xff]
          %v327 = vld [vmem:[%s271 + $0x20] sm:$0xff]
          %v328 = vld [vmem:[%s271 + $0x28] sm:$0xff]
          %v329 = vld [vmem:[%s271 + $0x30] sm:$0xff]
          %v330 = vld [vmem:[%s271 + $0x38] sm:$0xff]
          %v331 = vld [vmem:[%s271 + $0x40] sm:$0xff]
          %v332 = vld [vmem:[%s271 + $0x48] sm:$0xff]
          %v333 = vld [vmem:[%s271 + $0x50] sm:$0xff]
          %v334 = vld [vmem:[%s271 + $0x58] sm:$0xff]
          %v335 = vld [vmem:[%s271 + $0x60] sm:$0xff]
          %v336 = vld [vmem:[%s271 + $0x68] sm:$0xff]
          %v337 = vld [vmem:[%s271 + $0x70] sm:$0xff]
          %v338 = vld [vmem:[%s271 + $0x78] sm:$0xff]
          %v339 = vpack.c.bf16 %v327, %v323
          %v340 = vpack.c.bf16 %v328, %v324
          %v341 = vpack.c.bf16 %v329, %v325
          %v342 = vpack.c.bf16 %v330, %v326
          %v343 = vpack.c.bf16 %v335, %v331
          %v344 = vpack.c.bf16 %v336, %v332
          %v345 = vpack.c.bf16 %v337, %v333
          %v346 = vpack.c.bf16 %v338, %v334
          %v347 = vld [vmem:[#allocation8] sm:$0xff]
          %v348 = vld [vmem:[#allocation8 + $0x8] sm:$0xff]
          %v349 = vld [vmem:[#allocation8 + $0x10] sm:$0xff]
          %v350 = vld [vmem:[#allocation8 + $0x18] sm:$0xff]
          %v351 = vld [vmem:[#allocation8 + $0x20] sm:$0xff]
          %v352 = vld [vmem:[#allocation8 + $0x28] sm:$0xff]
          %v353 = vld [vmem:[#allocation8 + $0x30] sm:$0xff]
          %v354 = vld [vmem:[#allocation8 + $0x38] sm:$0xff]
          %v355 = vld [vmem:[#allocation8 + $0x40] sm:$0xff]
          %v356 = vld [vmem:[#allocation8 + $0x48] sm:$0xff]
          %v357 = vld [vmem:[#allocation8 + $0x50] sm:$0xff]
          %v358 = vld [vmem:[#allocation8 + $0x58] sm:$0xff]
          %v359 = vld [vmem:[#allocation8 + $0x60] sm:$0xff]
          %v360 = vld [vmem:[#allocation8 + $0x68] sm:$0xff]
          %v361 = vld [vmem:[#allocation8 + $0x70] sm:$0xff]
          %v362 = vld [vmem:[#allocation8 + $0x78] sm:$0xff]
          %v363 = vld [vmem:[#allocation8 + $0x80] sm:$0xff]
          %v364 = vld [vmem:[#allocation8 + $0x88] sm:$0xff]
          %v365 = vld [vmem:[#allocation8 + $0x90] sm:$0xff]
          %v366 = vld [vmem:[#allocation8 + $0x98] sm:$0xff]
          %v367 = vld [vmem:[#allocation8 + $0xa0] sm:$0xff]
          %v368 = vld [vmem:[#allocation8 + $0xa8] sm:$0xff]
          %v369 = vld [vmem:[#allocation8 + $0xb0] sm:$0xff]
          %v370 = vld [vmem:[#allocation8 + $0xb8] sm:$0xff]
          %v371 = vld [vmem:[#allocation8 + $0xc0] sm:$0xff]
          %v372 = vld [vmem:[#allocation8 + $0xc8] sm:$0xff]
          %v373 = vld [vmem:[#allocation8 + $0xd0] sm:$0xff]
          %v374 = vld [vmem:[#allocation8 + $0xd8] sm:$0xff]
          %v375 = vld [vmem:[#allocation8 + $0xe0] sm:$0xff]
          %v376 = vld [vmem:[#allocation8 + $0xe8] sm:$0xff]
          %v377 = vld [vmem:[#allocation8 + $0xf0] sm:$0xff]
          %v378 = vld [vmem:[#allocation8 + $0xf8] sm:$0xff]
          %v379 = vld [vmem:[#allocation8 + $0x100] sm:$0xff]
          %v380 = vld [vmem:[#allocation8 + $0x108] sm:$0xff]
          %v381 = vld [vmem:[#allocation8 + $0x110] sm:$0xff]
          %v382 = vld [vmem:[#allocation8 + $0x118] sm:$0xff]
          %v383 = vld [vmem:[#allocation8 + $0x120] sm:$0xff]
          %v384 = vld [vmem:[#allocation8 + $0x128] sm:$0xff]
          %v385 = vld [vmem:[#allocation8 + $0x130] sm:$0xff]
          %v386 = vld [vmem:[#allocation8 + $0x138] sm:$0xff]
          %v387 = vld [vmem:[#allocation8 + $0x140] sm:$0xff]
          %v388 = vld [vmem:[#allocation8 + $0x148] sm:$0xff]
          %v389 = vld [vmem:[#allocation8 + $0x150] sm:$0xff]
          %v390 = vld [vmem:[#allocation8 + $0x158] sm:$0xff]
          %v391 = vld [vmem:[#allocation8 + $0x160] sm:$0xff]
          %v392 = vld [vmem:[#allocation8 + $0x168] sm:$0xff]
          %v393 = vld [vmem:[#allocation8 + $0x170] sm:$0xff]
          %v394 = vld [vmem:[#allocation8 + $0x178] sm:$0xff]
          %v395 = vld [vmem:[#allocation8 + $0x180] sm:$0xff]
          %v396 = vld [vmem:[#allocation8 + $0x188] sm:$0xff]
          %v397 = vld [vmem:[#allocation8 + $0x190] sm:$0xff]
          %v398 = vld [vmem:[#allocation8 + $0x198] sm:$0xff]
          %v399 = vld [vmem:[#allocation8 + $0x1a0] sm:$0xff]
          %v400 = vld [vmem:[#allocation8 + $0x1a8] sm:$0xff]
          %v401 = vld [vmem:[#allocation8 + $0x1b0] sm:$0xff]
          %v402 = vld [vmem:[#allocation8 + $0x1b8] sm:$0xff]
          %v403 = vld [vmem:[#allocation8 + $0x1c0] sm:$0xff]
          %v404 = vld [vmem:[#allocation8 + $0x1c8] sm:$0xff]
          %v405 = vld [vmem:[#allocation8 + $0x1d0] sm:$0xff]
          %v406 = vld [vmem:[#allocation8 + $0x1d8] sm:$0xff]
          %v407 = vld [vmem:[#allocation8 + $0x1e0] sm:$0xff]
          %v408 = vld [vmem:[#allocation8 + $0x1e8] sm:$0xff]
          %v409 = vld [vmem:[#allocation8 + $0x1f0] sm:$0xff]
          %v410 = vld [vmem:[#allocation8 + $0x1f8] sm:$0xff]
          %v411 = vld [vmem:[#allocation8 + $0x200] sm:$0xff]
          %v412 = vld [vmem:[#allocation8 + $0x208] sm:$0xff]
          %v413 = vld [vmem:[#allocation8 + $0x210] sm:$0xff]
          %v414 = vld [vmem:[#allocation8 + $0x218] sm:$0xff]
          %v415 = vld [vmem:[#allocation8 + $0x220] sm:$0xff]
          %v416 = vld [vmem:[#allocation8 + $0x228] sm:$0xff]
          %v417 = vld [vmem:[#allocation8 + $0x230] sm:$0xff]
          %v418 = vld [vmem:[#allocation8 + $0x238] sm:$0xff]
          %v419 = vld [vmem:[#allocation8 + $0x240] sm:$0xff]
          %v420 = vld [vmem:[#allocation8 + $0x248] sm:$0xff]
          %v421 = vld [vmem:[#allocation8 + $0x250] sm:$0xff]
          %v422 = vld [vmem:[#allocation8 + $0x258] sm:$0xff]
          %v423 = vld [vmem:[#allocation8 + $0x260] sm:$0xff]
          %v424 = vld [vmem:[#allocation8 + $0x268] sm:$0xff]
          %v425 = vld [vmem:[#allocation8 + $0x270] sm:$0xff]
          %v426 = vld [vmem:[#allocation8 + $0x278] sm:$0xff]
          %v427 = vld [vmem:[#allocation8 + $0x280] sm:$0xff]
          %v428 = vld [vmem:[#allocation8 + $0x288] sm:$0xff]
          %v429 = vld [vmem:[#allocation8 + $0x290] sm:$0xff]
          %v430 = vld [vmem:[#allocation8 + $0x298] sm:$0xff]
          %v431 = vld [vmem:[#allocation8 + $0x2a0] sm:$0xff]
          %v432 = vld [vmem:[#allocation8 + $0x2a8] sm:$0xff]
          %v433 = vld [vmem:[#allocation8 + $0x2b0] sm:$0xff]
          %v434 = vld [vmem:[#allocation8 + $0x2b8] sm:$0xff]
          %v435 = vld [vmem:[#allocation8 + $0x2c0] sm:$0xff]
          %v436 = vld [vmem:[#allocation8 + $0x2c8] sm:$0xff]
          %v437 = vld [vmem:[#allocation8 + $0x2d0] sm:$0xff]
          %v438 = vld [vmem:[#allocation8 + $0x2d8] sm:$0xff]
          %v439 = vld [vmem:[#allocation8 + $0x2e0] sm:$0xff]
          %v440 = vld [vmem:[#allocation8 + $0x2e8] sm:$0xff]
          %v441 = vld [vmem:[#allocation8 + $0x2f0] sm:$0xff]
          %v442 = vld [vmem:[#allocation8 + $0x2f8] sm:$0xff]
          %v443 = vld [vmem:[#allocation8 + $0x300] sm:$0xff]
          %v444 = vld [vmem:[#allocation8 + $0x308] sm:$0xff]
          %v445 = vld [vmem:[#allocation8 + $0x310] sm:$0xff]
          %v446 = vld [vmem:[#allocation8 + $0x318] sm:$0xff]
          %v447 = vld [vmem:[#allocation8 + $0x320] sm:$0xff]
          %v448 = vld [vmem:[#allocation8 + $0x328] sm:$0xff]
          %v449 = vld [vmem:[#allocation8 + $0x330] sm:$0xff]
          %v450 = vld [vmem:[#allocation8 + $0x338] sm:$0xff]
          %v451 = vld [vmem:[#allocation8 + $0x340] sm:$0xff]
          %v452 = vld [vmem:[#allocation8 + $0x348] sm:$0xff]
          %v453 = vld [vmem:[#allocation8 + $0x350] sm:$0xff]
          %v454 = vld [vmem:[#allocation8 + $0x358] sm:$0xff]
          %v455 = vld [vmem:[#allocation8 + $0x360] sm:$0xff]
          %v456 = vld [vmem:[#allocation8 + $0x368] sm:$0xff]
          %v457 = vld [vmem:[#allocation8 + $0x370] sm:$0xff]
          %v458 = vld [vmem:[#allocation8 + $0x378] sm:$0xff]
          %v459 = vld [vmem:[#allocation8 + $0x380] sm:$0xff]
          %v460 = vld [vmem:[#allocation8 + $0x388] sm:$0xff]
          %v461 = vld [vmem:[#allocation8 + $0x390] sm:$0xff]
          %v462 = vld [vmem:[#allocation8 + $0x398] sm:$0xff]
          %v463 = vld [vmem:[#allocation8 + $0x3a0] sm:$0xff]
          %v464 = vld [vmem:[#allocation8 + $0x3a8] sm:$0xff]
          %v465 = vld [vmem:[#allocation8 + $0x3b0] sm:$0xff]
          %v466 = vld [vmem:[#allocation8 + $0x3b8] sm:$0xff]
          %v467 = vld [vmem:[#allocation8 + $0x3c0] sm:$0xff]
          %v468 = vld [vmem:[#allocation8 + $0x3c8] sm:$0xff]
          %v469 = vld [vmem:[#allocation8 + $0x3d0] sm:$0xff]
          %v470 = vld [vmem:[#allocation8 + $0x3d8] sm:$0xff]
          %v471 = vld [vmem:[#allocation8 + $0x3e0] sm:$0xff]
          %v472 = vld [vmem:[#allocation8 + $0x3e8] sm:$0xff]
          %v473 = vld [vmem:[#allocation8 + $0x3f0] sm:$0xff]
          %v474 = vld [vmem:[#allocation8 + $0x3f8] sm:$0xff]
          %v603 = vunpack.c.l.b16 %v347
          %v604 = vunpack.c.h.b16 %v347
          %v605 = vunpack.c.l.b16 %v348
          %v606 = vunpack.c.h.b16 %v348
          %v607 = vunpack.c.l.b16 %v349
          %v608 = vunpack.c.h.b16 %v349
          %v609 = vunpack.c.l.b16 %v350
          %v610 = vunpack.c.h.b16 %v350
          %v611 = vunpack.c.l.b16 %v351
          %v612 = vunpack.c.h.b16 %v351
          %v613 = vunpack.c.l.b16 %v352
          %v614 = vunpack.c.h.b16 %v352
          %v615 = vunpack.c.l.b16 %v353
          %v616 = vunpack.c.h.b16 %v353
          %v617 = vunpack.c.l.b16 %v354
          %v618 = vunpack.c.h.b16 %v354
          %v619 = vunpack.c.l.b16 %v355
          %v620 = vunpack.c.h.b16 %v355
          %v621 = vunpack.c.l.b16 %v356
          %v622 = vunpack.c.h.b16 %v356
          %v623 = vunpack.c.l.b16 %v357
          %v624 = vunpack.c.h.b16 %v357
          %v625 = vunpack.c.l.b16 %v358
          %v626 = vunpack.c.h.b16 %v358
          %v627 = vunpack.c.l.b16 %v359
          %v628 = vunpack.c.h.b16 %v359
          %v629 = vunpack.c.l.b16 %v360
          %v630 = vunpack.c.h.b16 %v360
          %v631 = vunpack.c.l.b16 %v361
          %v632 = vunpack.c.h.b16 %v361
          %v633 = vunpack.c.l.b16 %v362
          %v634 = vunpack.c.h.b16 %v362
          %v635 = vunpack.c.l.b16 %v363
          %v636 = vunpack.c.h.b16 %v363
          %v637 = vunpack.c.l.b16 %v364
          %v638 = vunpack.c.h.b16 %v364
          %v639 = vunpack.c.l.b16 %v365
          %v640 = vunpack.c.h.b16 %v365
          %v641 = vunpack.c.l.b16 %v366
          %v642 = vunpack.c.h.b16 %v366
          %v643 = vunpack.c.l.b16 %v367
          %v644 = vunpack.c.h.b16 %v367
          %v645 = vunpack.c.l.b16 %v368
          %v646 = vunpack.c.h.b16 %v368
          %v647 = vunpack.c.l.b16 %v369
          %v648 = vunpack.c.h.b16 %v369
          %v649 = vunpack.c.l.b16 %v370
          %v650 = vunpack.c.h.b16 %v370
          %v651 = vunpack.c.l.b16 %v371
          %v652 = vunpack.c.h.b16 %v371
          %v653 = vunpack.c.l.b16 %v372
          %v654 = vunpack.c.h.b16 %v372
          %v655 = vunpack.c.l.b16 %v373
          %v656 = vunpack.c.h.b16 %v373
          %v657 = vunpack.c.l.b16 %v374
          %v658 = vunpack.c.h.b16 %v374
          %v659 = vunpack.c.l.b16 %v375
          %v660 = vunpack.c.h.b16 %v375
          %v661 = vunpack.c.l.b16 %v376
          %v662 = vunpack.c.h.b16 %v376
          %v663 = vunpack.c.l.b16 %v377
          %v664 = vunpack.c.h.b16 %v377
          %v665 = vunpack.c.l.b16 %v378
          %v666 = vunpack.c.h.b16 %v378
          %v667 = vunpack.c.l.b16 %v379
          %v668 = vunpack.c.h.b16 %v379
          %v669 = vunpack.c.l.b16 %v380
          %v670 = vunpack.c.h.b16 %v380
          %v671 = vunpack.c.l.b16 %v381
          %v672 = vunpack.c.h.b16 %v381
          %v673 = vunpack.c.l.b16 %v382
          %v674 = vunpack.c.h.b16 %v382
          %v675 = vunpack.c.l.b16 %v383
          %v676 = vunpack.c.h.b16 %v383
          %v677 = vunpack.c.l.b16 %v384
          %v678 = vunpack.c.h.b16 %v384
          %v679 = vunpack.c.l.b16 %v385
          %v680 = vunpack.c.h.b16 %v385
          %v681 = vunpack.c.l.b16 %v386
          %v682 = vunpack.c.h.b16 %v386
          %v683 = vunpack.c.l.b16 %v387
          %v684 = vunpack.c.h.b16 %v387
          %v685 = vunpack.c.l.b16 %v388
          %v686 = vunpack.c.h.b16 %v388
          %v687 = vunpack.c.l.b16 %v389
          %v688 = vunpack.c.h.b16 %v389
          %v689 = vunpack.c.l.b16 %v390
          %v690 = vunpack.c.h.b16 %v390
          %v691 = vunpack.c.l.b16 %v391
          %v692 = vunpack.c.h.b16 %v391
          %v693 = vunpack.c.l.b16 %v392
          %v694 = vunpack.c.h.b16 %v392
          %v695 = vunpack.c.l.b16 %v393
          %v696 = vunpack.c.h.b16 %v393
          %v697 = vunpack.c.l.b16 %v394
          %v698 = vunpack.c.h.b16 %v394
          %v699 = vunpack.c.l.b16 %v395
          %v700 = vunpack.c.h.b16 %v395
          %v701 = vunpack.c.l.b16 %v396
          %v702 = vunpack.c.h.b16 %v396
          %v703 = vunpack.c.l.b16 %v397
          %v704 = vunpack.c.h.b16 %v397
          %v705 = vunpack.c.l.b16 %v398
          %v706 = vunpack.c.h.b16 %v398
          %v707 = vunpack.c.l.b16 %v399
          %v708 = vunpack.c.h.b16 %v399
          %v709 = vunpack.c.l.b16 %v400
          %v710 = vunpack.c.h.b16 %v400
          %v711 = vunpack.c.l.b16 %v401
          %v712 = vunpack.c.h.b16 %v401
          %v713 = vunpack.c.l.b16 %v402
          %v714 = vunpack.c.h.b16 %v402
          %v715 = vunpack.c.l.b16 %v403
          %v716 = vunpack.c.h.b16 %v403
          %v717 = vunpack.c.l.b16 %v404
          %v718 = vunpack.c.h.b16 %v404
          %v719 = vunpack.c.l.b16 %v405
          %v720 = vunpack.c.h.b16 %v405
          %v721 = vunpack.c.l.b16 %v406
          %v722 = vunpack.c.h.b16 %v406
          %v723 = vunpack.c.l.b16 %v407
          %v724 = vunpack.c.h.b16 %v407
          %v725 = vunpack.c.l.b16 %v408
          %v726 = vunpack.c.h.b16 %v408
          %v727 = vunpack.c.l.b16 %v409
          %v728 = vunpack.c.h.b16 %v409
          %v729 = vunpack.c.l.b16 %v410
          %v730 = vunpack.c.h.b16 %v410
          %v731 = vunpack.c.l.b16 %v411
          %v732 = vunpack.c.h.b16 %v411
          %v733 = vunpack.c.l.b16 %v412
          %v734 = vunpack.c.h.b16 %v412
          %v735 = vunpack.c.l.b16 %v413
          %v736 = vunpack.c.h.b16 %v413
          %v737 = vunpack.c.l.b16 %v414
          %v738 = vunpack.c.h.b16 %v414
          %v739 = vunpack.c.l.b16 %v415
          %v740 = vunpack.c.h.b16 %v415
          %v741 = vunpack.c.l.b16 %v416
          %v742 = vunpack.c.h.b16 %v416
          %v743 = vunpack.c.l.b16 %v417
          %v744 = vunpack.c.h.b16 %v417
          %v745 = vunpack.c.l.b16 %v418
          %v746 = vunpack.c.h.b16 %v418
          %v747 = vunpack.c.l.b16 %v419
          %v748 = vunpack.c.h.b16 %v419
          %v749 = vunpack.c.l.b16 %v420
          %v750 = vunpack.c.h.b16 %v420
          %v751 = vunpack.c.l.b16 %v421
          %v752 = vunpack.c.h.b16 %v421
          %v753 = vunpack.c.l.b16 %v422
          %v754 = vunpack.c.h.b16 %v422
          %v755 = vunpack.c.l.b16 %v423
          %v756 = vunpack.c.h.b16 %v423
          %v757 = vunpack.c.l.b16 %v424
          %v758 = vunpack.c.h.b16 %v424
          %v759 = vunpack.c.l.b16 %v425
          %v760 = vunpack.c.h.b16 %v425
          %v761 = vunpack.c.l.b16 %v426
          %v762 = vunpack.c.h.b16 %v426
          %v763 = vunpack.c.l.b16 %v427
          %v764 = vunpack.c.h.b16 %v427
          %v765 = vunpack.c.l.b16 %v428
          %v766 = vunpack.c.h.b16 %v428
          %v767 = vunpack.c.l.b16 %v429
          %v768 = vunpack.c.h.b16 %v429
          %v769 = vunpack.c.l.b16 %v430
          %v770 = vunpack.c.h.b16 %v430
          %v771 = vunpack.c.l.b16 %v431
          %v772 = vunpack.c.h.b16 %v431
          %v773 = vunpack.c.l.b16 %v432
          %v774 = vunpack.c.h.b16 %v432
          %v775 = vunpack.c.l.b16 %v433
          %v776 = vunpack.c.h.b16 %v433
          %v777 = vunpack.c.l.b16 %v434
          %v778 = vunpack.c.h.b16 %v434
          %v779 = vunpack.c.l.b16 %v435
          %v780 = vunpack.c.h.b16 %v435
          %v781 = vunpack.c.l.b16 %v436
          %v782 = vunpack.c.h.b16 %v436
          %v783 = vunpack.c.l.b16 %v437
          %v784 = vunpack.c.h.b16 %v437
          %v785 = vunpack.c.l.b16 %v438
          %v786 = vunpack.c.h.b16 %v438
          %v787 = vunpack.c.l.b16 %v439
          %v788 = vunpack.c.h.b16 %v439
          %v789 = vunpack.c.l.b16 %v440
          %v790 = vunpack.c.h.b16 %v440
          %v791 = vunpack.c.l.b16 %v441
          %v792 = vunpack.c.h.b16 %v441
          %v793 = vunpack.c.l.b16 %v442
          %v794 = vunpack.c.h.b16 %v442
          %v795 = vunpack.c.l.b16 %v443
          %v796 = vunpack.c.h.b16 %v443
          %v797 = vunpack.c.l.b16 %v444
          %v798 = vunpack.c.h.b16 %v444
          %v799 = vunpack.c.l.b16 %v445
          %v800 = vunpack.c.h.b16 %v445
          %v801 = vunpack.c.l.b16 %v446
          %v802 = vunpack.c.h.b16 %v446
          %v803 = vunpack.c.l.b16 %v447
          %v804 = vunpack.c.h.b16 %v447
          %v805 = vunpack.c.l.b16 %v448
          %v806 = vunpack.c.h.b16 %v448
          %v807 = vunpack.c.l.b16 %v449
          %v808 = vunpack.c.h.b16 %v449
          %v809 = vunpack.c.l.b16 %v450
          %v810 = vunpack.c.h.b16 %v450
          %v811 = vunpack.c.l.b16 %v451
          %v812 = vunpack.c.h.b16 %v451
          %v813 = vunpack.c.l.b16 %v452
          %v814 = vunpack.c.h.b16 %v452
          %v815 = vunpack.c.l.b16 %v453
          %v816 = vunpack.c.h.b16 %v453
          %v817 = vunpack.c.l.b16 %v454
          %v818 = vunpack.c.h.b16 %v454
          %v819 = vunpack.c.l.b16 %v455
          %v820 = vunpack.c.h.b16 %v455
          %v821 = vunpack.c.l.b16 %v456
          %v822 = vunpack.c.h.b16 %v456
          %v823 = vunpack.c.l.b16 %v457
          %v824 = vunpack.c.h.b16 %v457
          %v825 = vunpack.c.l.b16 %v458
          %v826 = vunpack.c.h.b16 %v458
          %v827 = vunpack.c.l.b16 %v459
          %v828 = vunpack.c.h.b16 %v459
          %v829 = vunpack.c.l.b16 %v460
          %v830 = vunpack.c.h.b16 %v460
          %v831 = vunpack.c.l.b16 %v461
          %v832 = vunpack.c.h.b16 %v461
          %v833 = vunpack.c.l.b16 %v462
          %v834 = vunpack.c.h.b16 %v462
          %v835 = vunpack.c.l.b16 %v463
          %v836 = vunpack.c.h.b16 %v463
          %v837 = vunpack.c.l.b16 %v464
          %v838 = vunpack.c.h.b16 %v464
          %v839 = vunpack.c.l.b16 %v465
          %v840 = vunpack.c.h.b16 %v465
          %v841 = vunpack.c.l.b16 %v466
          %v842 = vunpack.c.h.b16 %v466
          %v843 = vunpack.c.l.b16 %v467
          %v844 = vunpack.c.h.b16 %v467
          %v845 = vunpack.c.l.b16 %v468
          %v846 = vunpack.c.h.b16 %v468
          %v847 = vunpack.c.l.b16 %v469
          %v848 = vunpack.c.h.b16 %v469
          %v849 = vunpack.c.l.b16 %v470
          %v850 = vunpack.c.h.b16 %v470
          %v851 = vunpack.c.l.b16 %v471
          %v852 = vunpack.c.h.b16 %v471
          %v853 = vunpack.c.l.b16 %v472
          %v854 = vunpack.c.h.b16 %v472
          %v855 = vunpack.c.l.b16 %v473
          %v856 = vunpack.c.h.b16 %v473
          %v857 = vunpack.c.l.b16 %v474
          %v858 = vunpack.c.h.b16 %v474
          %v859 = vpack.c.b16 %v607, %v603
          %v860 = vpack.c.b16 %v608, %v604
          %v861 = vpack.c.b16 %v609, %v605
          %v862 = vpack.c.b16 %v610, %v606
          %v863 = vpack.c.b16 %v615, %v611
          %v864 = vpack.c.b16 %v616, %v612
          %v865 = vpack.c.b16 %v617, %v613
          %v866 = vpack.c.b16 %v618, %v614
          %v867 = vpack.c.b16 %v623, %v619
          %v868 = vpack.c.b16 %v624, %v620
          %v869 = vpack.c.b16 %v625, %v621
          %v870 = vpack.c.b16 %v626, %v622
          %v871 = vpack.c.b16 %v631, %v627
          %v872 = vpack.c.b16 %v632, %v628
          %v873 = vpack.c.b16 %v633, %v629
          %v874 = vpack.c.b16 %v634, %v630
          %v875 = vpack.c.b16 %v639, %v635
          %v876 = vpack.c.b16 %v640, %v636
          %v877 = vpack.c.b16 %v641, %v637
          %v878 = vpack.c.b16 %v642, %v638
          %v879 = vpack.c.b16 %v647, %v643
          %v880 = vpack.c.b16 %v648, %v644
          %v881 = vpack.c.b16 %v649, %v645
          %v882 = vpack.c.b16 %v650, %v646
          %v883 = vpack.c.b16 %v655, %v651
          %v884 = vpack.c.b16 %v656, %v652
          %v885 = vpack.c.b16 %v657, %v653
          %v886 = vpack.c.b16 %v658, %v654
          %v887 = vpack.c.b16 %v663, %v659
          %v888 = vpack.c.b16 %v664, %v660
          %v889 = vpack.c.b16 %v665, %v661
          %v890 = vpack.c.b16 %v666, %v662
          %v891 = vpack.c.b16 %v671, %v667
          %v892 = vpack.c.b16 %v672, %v668
          %v893 = vpack.c.b16 %v673, %v669
          %v894 = vpack.c.b16 %v674, %v670
          %v895 = vpack.c.b16 %v679, %v675
          %v896 = vpack.c.b16 %v680, %v676
          %v897 = vpack.c.b16 %v681, %v677
          %v898 = vpack.c.b16 %v682, %v678
          %v899 = vpack.c.b16 %v687, %v683
          %v900 = vpack.c.b16 %v688, %v684
          %v901 = vpack.c.b16 %v689, %v685
          %v902 = vpack.c.b16 %v690, %v686
          %v903 = vpack.c.b16 %v695, %v691
          %v904 = vpack.c.b16 %v696, %v692
          %v905 = vpack.c.b16 %v697, %v693
          %v906 = vpack.c.b16 %v698, %v694
          %v907 = vpack.c.b16 %v703, %v699
          %v908 = vpack.c.b16 %v704, %v700
          %v909 = vpack.c.b16 %v705, %v701
          %v910 = vpack.c.b16 %v706, %v702
          %v911 = vpack.c.b16 %v711, %v707
          %v912 = vpack.c.b16 %v712, %v708
          %v913 = vpack.c.b16 %v713, %v709
          %v914 = vpack.c.b16 %v714, %v710
          %v915 = vpack.c.b16 %v719, %v715
          %v916 = vpack.c.b16 %v720, %v716
          %v917 = vpack.c.b16 %v721, %v717
          %v918 = vpack.c.b16 %v722, %v718
          %v919 = vpack.c.b16 %v727, %v723
          %v920 = vpack.c.b16 %v728, %v724
          %v921 = vpack.c.b16 %v729, %v725
          %v922 = vpack.c.b16 %v730, %v726
          %v923 = vpack.c.b16 %v735, %v731
          %v924 = vpack.c.b16 %v736, %v732
          %v925 = vpack.c.b16 %v737, %v733
          %v926 = vpack.c.b16 %v738, %v734
          %v927 = vpack.c.b16 %v743, %v739
          %v928 = vpack.c.b16 %v744, %v740
          %v929 = vpack.c.b16 %v745, %v741
          %v930 = vpack.c.b16 %v746, %v742
          %v931 = vpack.c.b16 %v751, %v747
          %v932 = vpack.c.b16 %v752, %v748
          %v933 = vpack.c.b16 %v753, %v749
          %v934 = vpack.c.b16 %v754, %v750
          %v935 = vpack.c.b16 %v759, %v755
          %v936 = vpack.c.b16 %v760, %v756
          %v937 = vpack.c.b16 %v761, %v757
          %v938 = vpack.c.b16 %v762, %v758
          %v939 = vpack.c.b16 %v767, %v763
          %v940 = vpack.c.b16 %v768, %v764
          %v941 = vpack.c.b16 %v769, %v765
          %v942 = vpack.c.b16 %v770, %v766
          %v943 = vpack.c.b16 %v775, %v771
          %v944 = vpack.c.b16 %v776, %v772
          %v945 = vpack.c.b16 %v777, %v773
          %v946 = vpack.c.b16 %v778, %v774
          %v947 = vpack.c.b16 %v783, %v779
          %v948 = vpack.c.b16 %v784, %v780
          %v949 = vpack.c.b16 %v785, %v781
          %v950 = vpack.c.b16 %v786, %v782
          %v951 = vpack.c.b16 %v791, %v787
          %v952 = vpack.c.b16 %v792, %v788
          %v953 = vpack.c.b16 %v793, %v789
          %v954 = vpack.c.b16 %v794, %v790
          %v955 = vpack.c.b16 %v799, %v795
          %v956 = vpack.c.b16 %v800, %v796
          %v957 = vpack.c.b16 %v801, %v797
          %v958 = vpack.c.b16 %v802, %v798
          %v959 = vpack.c.b16 %v807, %v803
          %v960 = vpack.c.b16 %v808, %v804
          %v961 = vpack.c.b16 %v809, %v805
          %v962 = vpack.c.b16 %v810, %v806
          %v963 = vpack.c.b16 %v815, %v811
          %v964 = vpack.c.b16 %v816, %v812
          %v965 = vpack.c.b16 %v817, %v813
          %v966 = vpack.c.b16 %v818, %v814
          %v967 = vpack.c.b16 %v823, %v819
          %v968 = vpack.c.b16 %v824, %v820
          %v969 = vpack.c.b16 %v825, %v821
          %v970 = vpack.c.b16 %v826, %v822
          %v971 = vpack.c.b16 %v831, %v827
          %v972 = vpack.c.b16 %v832, %v828
          %v973 = vpack.c.b16 %v833, %v829
          %v974 = vpack.c.b16 %v834, %v830
          %v975 = vpack.c.b16 %v839, %v835
          %v976 = vpack.c.b16 %v840, %v836
          %v977 = vpack.c.b16 %v841, %v837
          %v978 = vpack.c.b16 %v842, %v838
          %v979 = vpack.c.b16 %v847, %v843
          %v980 = vpack.c.b16 %v848, %v844
          %v981 = vpack.c.b16 %v849, %v845
          %v982 = vpack.c.b16 %v850, %v846
          %v983 = vpack.c.b16 %v855, %v851
          %v984 = vpack.c.b16 %v856, %v852
          %v985 = vpack.c.b16 %v857, %v853
          %v986 = vpack.c.b16 %v858, %v854
          %1115 = vmatpush.bf16.msra.mxu0 %v887
          %1116 = vmatpush.bf16.msra.mxu0 %v883
          %1117 = vmatpush.bf16.msra.mxu0 %v879
          %1118 = vmatpush.bf16.msra.mxu0 %v875
          %1119 = vmatpush.bf16.msra.mxu0 %v871
          %1120 = vmatpush.bf16.msra.mxu0 %v867
          %1121 = vmatpush.bf16.msra.mxu0 %v863
          %1122 = vmatpush.bf16.msra.mxu0 %v859
          %1123 = vmatmul.bf16.gmra.mxu0 %v339
          %v1124 = vpop.f32.mrf.mxu0
          %v1125 = vadd.f32 0.0, %v1124
          %v1126 = vpop.f32.mrf.mxu0
          %v1127 = vadd.f32 0.0, %v1126
          %1128 = vmatmul.bf16.gmra.mxu0 %v343
          %v1129 = vpop.f32.mrf.mxu0
          %v1130 = vadd.f32 0.0, %v1129
          %v1131 = vpop.f32.mrf.mxu0
          %v1132 = vadd.f32 0.0, %v1131
          %1133 = vdwg.mxu0
          %1134 = vmatpush.bf16.msra.mxu0 %v919
          %1135 = vmatpush.bf16.msra.mxu0 %v915
          %1136 = vmatpush.bf16.msra.mxu0 %v911
          %1137 = vmatpush.bf16.msra.mxu0 %v907
          %1138 = vmatpush.bf16.msra.mxu0 %v903
          %1139 = vmatpush.bf16.msra.mxu0 %v899
          %1140 = vmatpush.bf16.msra.mxu0 %v895
          %1141 = vmatpush.bf16.msra.mxu0 %v891
          %1142 = vmatmul.bf16.gmra.mxu0 %v340
          %v1143 = vpop.f32.mrf.mxu0
          %v1144 = vadd.f32 %v1125, %v1143
          %v1145 = vpop.f32.mrf.mxu0
          %v1146 = vadd.f32 %v1127, %v1145
          %1147 = vmatmul.bf16.gmra.mxu0 %v344
          %v1148 = vpop.f32.mrf.mxu0
          %v1149 = vadd.f32 %v1130, %v1148
          %v1150 = vpop.f32.mrf.mxu0
          %v1151 = vadd.f32 %v1132, %v1150
          %1152 = vdwg.mxu0
          %1153 = vmatpush.bf16.msra.mxu0 %v951
          %1154 = vmatpush.bf16.msra.mxu0 %v947
          %1155 = vmatpush.bf16.msra.mxu0 %v943
          %1156 = vmatpush.bf16.msra.mxu0 %v939
          %1157 = vmatpush.bf16.msra.mxu0 %v935
          %1158 = vmatpush.bf16.msra.mxu0 %v931
          %1159 = vmatpush.bf16.msra.mxu0 %v927
          %1160 = vmatpush.bf16.msra.mxu0 %v923
          %1161 = vmatmul.bf16.gmra.mxu0 %v341
          %v1162 = vpop.f32.mrf.mxu0
          %v1163 = vadd.f32 %v1144, %v1162
          %v1164 = vpop.f32.mrf.mxu0
          %v1165 = vadd.f32 %v1146, %v1164
          %1166 = vmatmul.bf16.gmra.mxu0 %v345
          %v1167 = vpop.f32.mrf.mxu0
          %v1168 = vadd.f32 %v1149, %v1167
          %v1169 = vpop.f32.mrf.mxu0
          %v1170 = vadd.f32 %v1151, %v1169
          %1171 = vdwg.mxu0
          %1172 = vmatpush.bf16.msra.mxu0 %v983
          %1173 = vmatpush.bf16.msra.mxu0 %v979
          %1174 = vmatpush.bf16.msra.mxu0 %v975
          %1175 = vmatpush.bf16.msra.mxu0 %v971
          %1176 = vmatpush.bf16.msra.mxu0 %v967
          %1177 = vmatpush.bf16.msra.mxu0 %v963
          %1178 = vmatpush.bf16.msra.mxu0 %v959
          %1179 = vmatpush.bf16.msra.mxu0 %v955
          %1180 = vmatmul.bf16.gmra.mxu0 %v342
          %v1181 = vpop.f32.mrf.mxu0
          %v1182 = vadd.f32 %v1163, %v1181
          %v1183 = vpop.f32.mrf.mxu0
          %v1184 = vadd.f32 %v1165, %v1183
          %1185 = vmatmul.bf16.gmra.mxu0 %v346
          %v1186 = vpop.f32.mrf.mxu0
          %v1187 = vadd.f32 %v1168, %v1186
          %v1188 = vpop.f32.mrf.mxu0
          %v1189 = vadd.f32 %v1170, %v1188
          %1190 = vdwg.mxu0
          %1191 = vmatpush.bf16.msra.mxu0 %v888
          %1192 = vmatpush.bf16.msra.mxu0 %v884
          %1193 = vmatpush.bf16.msra.mxu0 %v880
          %1194 = vmatpush.bf16.msra.mxu0 %v876
          %1195 = vmatpush.bf16.msra.mxu0 %v872
          %1196 = vmatpush.bf16.msra.mxu0 %v868
          %1197 = vmatpush.bf16.msra.mxu0 %v864
          %1198 = vmatpush.bf16.msra.mxu0 %v860
          %1199 = vmatmul.bf16.gmra.mxu0 %v339
          %v1200 = vpop.f32.mrf.mxu0
          %v1201 = vadd.f32 0.0, %v1200
          %v1202 = vpop.f32.mrf.mxu0
          %v1203 = vadd.f32 0.0, %v1202
          %1204 = vmatmul.bf16.gmra.mxu0 %v343
          %v1205 = vpop.f32.mrf.mxu0
          %v1206 = vadd.f32 0.0, %v1205
          %v1207 = vpop.f32.mrf.mxu0
          %v1208 = vadd.f32 0.0, %v1207
          %1209 = vdwg.mxu0
          %1210 = vmatpush.bf16.msra.mxu0 %v920
          %1211 = vmatpush.bf16.msra.mxu0 %v916
          %1212 = vmatpush.bf16.msra.mxu0 %v912
          %1213 = vmatpush.bf16.msra.mxu0 %v908
          %1214 = vmatpush.bf16.msra.mxu0 %v904
          %1215 = vmatpush.bf16.msra.mxu0 %v900
          %1216 = vmatpush.bf16.msra.mxu0 %v896
          %1217 = vmatpush.bf16.msra.mxu0 %v892
          %1218 = vmatmul.bf16.gmra.mxu0 %v340
          %v1219 = vpop.f32.mrf.mxu0
          %v1220 = vadd.f32 %v1201, %v1219
          %v1221 = vpop.f32.mrf.mxu0
          %v1222 = vadd.f32 %v1203, %v1221
          %1223 = vmatmul.bf16.gmra.mxu0 %v344
          %v1224 = vpop.f32.mrf.mxu0
          %v1225 = vadd.f32 %v1206, %v1224
          %v1226 = vpop.f32.mrf.mxu0
          %v1227 = vadd.f32 %v1208, %v1226
          %1228 = vdwg.mxu0
          %1229 = vmatpush.bf16.msra.mxu0 %v952
          %1230 = vmatpush.bf16.msra.mxu0 %v948
          %1231 = vmatpush.bf16.msra.mxu0 %v944
          %1232 = vmatpush.bf16.msra.mxu0 %v940
          %1233 = vmatpush.bf16.msra.mxu0 %v936
          %1234 = vmatpush.bf16.msra.mxu0 %v932
          %1235 = vmatpush.bf16.msra.mxu0 %v928
          %1236 = vmatpush.bf16.msra.mxu0 %v924
          %1237 = vmatmul.bf16.gmra.mxu0 %v341
          %v1238 = vpop.f32.mrf.mxu0
          %v1239 = vadd.f32 %v1220, %v1238
          %v1240 = vpop.f32.mrf.mxu0
          %v1241 = vadd.f32 %v1222, %v1240
          %1242 = vmatmul.bf16.gmra.mxu0 %v345
          %v1243 = vpop.f32.mrf.mxu0
          %v1244 = vadd.f32 %v1225, %v1243
          %v1245 = vpop.f32.mrf.mxu0
          %v1246 = vadd.f32 %v1227, %v1245
          %1247 = vdwg.mxu0
          %1248 = vmatpush.bf16.msra.mxu0 %v984
          %1249 = vmatpush.bf16.msra.mxu0 %v980
          %1250 = vmatpush.bf16.msra.mxu0 %v976
          %1251 = vmatpush.bf16.msra.mxu0 %v972
          %1252 = vmatpush.bf16.msra.mxu0 %v968
          %1253 = vmatpush.bf16.msra.mxu0 %v964
          %1254 = vmatpush.bf16.msra.mxu0 %v960
          %1255 = vmatpush.bf16.msra.mxu0 %v956
          %1256 = vmatmul.bf16.gmra.mxu0 %v342
          %v1257 = vpop.f32.mrf.mxu0
          %v1258 = vadd.f32 %v1239, %v1257
          %v1259 = vpop.f32.mrf.mxu0
          %v1260 = vadd.f32 %v1241, %v1259
          %1261 = vmatmul.bf16.gmra.mxu0 %v346
          %v1262 = vpop.f32.mrf.mxu0
          %v1263 = vadd.f32 %v1244, %v1262
          %v1264 = vpop.f32.mrf.mxu0
          %v1265 = vadd.f32 %v1246, %v1264
          %1266 = vdwg.mxu0
          %1267 = vmatpush.bf16.msra.mxu0 %v889
          %1268 = vmatpush.bf16.msra.mxu0 %v885
          %1269 = vmatpush.bf16.msra.mxu0 %v881
          %1270 = vmatpush.bf16.msra.mxu0 %v877
          %1271 = vmatpush.bf16.msra.mxu0 %v873
          %1272 = vmatpush.bf16.msra.mxu0 %v869
          %1273 = vmatpush.bf16.msra.mxu0 %v865
          %1274 = vmatpush.bf16.msra.mxu0 %v861
          %1275 = vmatmul.bf16.gmra.mxu0 %v339
          %v1276 = vpop.f32.mrf.mxu0
          %v1277 = vadd.f32 0.0, %v1276
          %v1278 = vpop.f32.mrf.mxu0
          %v1279 = vadd.f32 0.0, %v1278
          %1280 = vmatmul.bf16.gmra.mxu0 %v343
          %v1281 = vpop.f32.mrf.mxu0
          %v1282 = vadd.f32 0.0, %v1281
          %v1283 = vpop.f32.mrf.mxu0
          %v1284 = vadd.f32 0.0, %v1283
          %1285 = vdwg.mxu0
          %1286 = vmatpush.bf16.msra.mxu0 %v921
          %1287 = vmatpush.bf16.msra.mxu0 %v917
          %1288 = vmatpush.bf16.msra.mxu0 %v913
          %1289 = vmatpush.bf16.msra.mxu0 %v909
          %1290 = vmatpush.bf16.msra.mxu0 %v905
          %1291 = vmatpush.bf16.msra.mxu0 %v901
          %1292 = vmatpush.bf16.msra.mxu0 %v897
          %1293 = vmatpush.bf16.msra.mxu0 %v893
          %1294 = vmatmul.bf16.gmra.mxu0 %v340
          %v1295 = vpop.f32.mrf.mxu0
          %v1296 = vadd.f32 %v1277, %v1295
          %v1297 = vpop.f32.mrf.mxu0
          %v1298 = vadd.f32 %v1279, %v1297
          %1299 = vmatmul.bf16.gmra.mxu0 %v344
          %v1300 = vpop.f32.mrf.mxu0
          %v1301 = vadd.f32 %v1282, %v1300
          %v1302 = vpop.f32.mrf.mxu0
          %v1303 = vadd.f32 %v1284, %v1302
          %1304 = vdwg.mxu0
          %1305 = vmatpush.bf16.msra.mxu0 %v953
          %1306 = vmatpush.bf16.msra.mxu0 %v949
          %1307 = vmatpush.bf16.msra.mxu0 %v945
          %1308 = vmatpush.bf16.msra.mxu0 %v941
          %1309 = vmatpush.bf16.msra.mxu0 %v937
          %1310 = vmatpush.bf16.msra.mxu0 %v933
          %1311 = vmatpush.bf16.msra.mxu0 %v929
          %1312 = vmatpush.bf16.msra.mxu0 %v925
          %1313 = vmatmul.bf16.gmra.mxu0 %v341
          %v1314 = vpop.f32.mrf.mxu0
          %v1315 = vadd.f32 %v1296, %v1314
          %v1316 = vpop.f32.mrf.mxu0
          %v1317 = vadd.f32 %v1298, %v1316
          %1318 = vmatmul.bf16.gmra.mxu0 %v345
          %v1319 = vpop.f32.mrf.mxu0
          %v1320 = vadd.f32 %v1301, %v1319
          %v1321 = vpop.f32.mrf.mxu0
          %v1322 = vadd.f32 %v1303, %v1321
          %1323 = vdwg.mxu0
          %1324 = vmatpush.bf16.msra.mxu0 %v985
          %1325 = vmatpush.bf16.msra.mxu0 %v981
          %1326 = vmatpush.bf16.msra.mxu0 %v977
          %1327 = vmatpush.bf16.msra.mxu0 %v973
          %1328 = vmatpush.bf16.msra.mxu0 %v969
          %1329 = vmatpush.bf16.msra.mxu0 %v965
          %1330 = vmatpush.bf16.msra.mxu0 %v961
          %1331 = vmatpush.bf16.msra.mxu0 %v957
          %1332 = vmatmul.bf16.gmra.mxu0 %v342
          %v1333 = vpop.f32.mrf.mxu0
          %v1334 = vadd.f32 %v1315, %v1333
          %v1335 = vpop.f32.mrf.mxu0
          %v1336 = vadd.f32 %v1317, %v1335
          %1337 = vmatmul.bf16.gmra.mxu0 %v346
          %v1338 = vpop.f32.mrf.mxu0
          %v1339 = vadd.f32 %v1320, %v1338
          %v1340 = vpop.f32.mrf.mxu0
          %v1341 = vadd.f32 %v1322, %v1340
          %1342 = vdwg.mxu0
          %1343 = vmatpush.bf16.msra.mxu0 %v890
          %1344 = vmatpush.bf16.msra.mxu0 %v886
          %1345 = vmatpush.bf16.msra.mxu0 %v882
          %1346 = vmatpush.bf16.msra.mxu0 %v878
          %1347 = vmatpush.bf16.msra.mxu0 %v874
          %1348 = vmatpush.bf16.msra.mxu0 %v870
          %1349 = vmatpush.bf16.msra.mxu0 %v866
          %1350 = vmatpush.bf16.msra.mxu0 %v862
          %1351 = vmatmul.bf16.gmra.mxu0 %v339
          %v1352 = vpop.f32.mrf.mxu0
          %v1353 = vadd.f32 0.0, %v1352
          %v1354 = vpop.f32.mrf.mxu0
          %v1355 = vadd.f32 0.0, %v1354
          %1356 = vmatmul.bf16.gmra.mxu0 %v343
          %v1357 = vpop.f32.mrf.mxu0
          %v1358 = vadd.f32 0.0, %v1357
          %v1359 = vpop.f32.mrf.mxu0
          %v1360 = vadd.f32 0.0, %v1359
          %1361 = vdwg.mxu0
          %1362 = vmatpush.bf16.msra.mxu0 %v922
          %1363 = vmatpush.bf16.msra.mxu0 %v918
          %1364 = vmatpush.bf16.msra.mxu0 %v914
          %1365 = vmatpush.bf16.msra.mxu0 %v910
          %1366 = vmatpush.bf16.msra.mxu0 %v906
          %1367 = vmatpush.bf16.msra.mxu0 %v902
          %1368 = vmatpush.bf16.msra.mxu0 %v898
          %1369 = vmatpush.bf16.msra.mxu0 %v894
          %1370 = vmatmul.bf16.gmra.mxu0 %v340
          %v1371 = vpop.f32.mrf.mxu0
          %v1372 = vadd.f32 %v1353, %v1371
          %v1373 = vpop.f32.mrf.mxu0
          %v1374 = vadd.f32 %v1355, %v1373
          %1375 = vmatmul.bf16.gmra.mxu0 %v344
          %v1376 = vpop.f32.mrf.mxu0
          %v1377 = vadd.f32 %v1358, %v1376
          %v1378 = vpop.f32.mrf.mxu0
          %v1379 = vadd.f32 %v1360, %v1378
          %1380 = vdwg.mxu0
          %1381 = vmatpush.bf16.msra.mxu0 %v954
          %1382 = vmatpush.bf16.msra.mxu0 %v950
          %1383 = vmatpush.bf16.msra.mxu0 %v946
          %1384 = vmatpush.bf16.msra.mxu0 %v942
          %1385 = vmatpush.bf16.msra.mxu0 %v938
          %1386 = vmatpush.bf16.msra.mxu0 %v934
          %1387 = vmatpush.bf16.msra.mxu0 %v930
          %1388 = vmatpush.bf16.msra.mxu0 %v926
          %1389 = vmatmul.bf16.gmra.mxu0 %v341
          %v1390 = vpop.f32.mrf.mxu0
          %v1391 = vadd.f32 %v1372, %v1390
          %v1392 = vpop.f32.mrf.mxu0
          %v1393 = vadd.f32 %v1374, %v1392
          %1394 = vmatmul.bf16.gmra.mxu0 %v345
          %v1395 = vpop.f32.mrf.mxu0
          %v1396 = vadd.f32 %v1377, %v1395
          %v1397 = vpop.f32.mrf.mxu0
          %v1398 = vadd.f32 %v1379, %v1397
          %1399 = vdwg.mxu0
          %1400 = vmatpush.bf16.msra.mxu0 %v986
          %1401 = vmatpush.bf16.msra.mxu0 %v982
          %1402 = vmatpush.bf16.msra.mxu0 %v978
          %1403 = vmatpush.bf16.msra.mxu0 %v974
          %1404 = vmatpush.bf16.msra.mxu0 %v970
          %1405 = vmatpush.bf16.msra.mxu0 %v966
          %1406 = vmatpush.bf16.msra.mxu0 %v962
          %1407 = vmatpush.bf16.msra.mxu0 %v958
          %1408 = vmatmul.bf16.gmra.mxu0 %v342
          %v1409 = vpop.f32.mrf.mxu0
          %v1410 = vadd.f32 %v1391, %v1409
          %v1411 = vpop.f32.mrf.mxu0
          %v1412 = vadd.f32 %v1393, %v1411
          %1413 = vmatmul.bf16.gmra.mxu0 %v346
          %v1414 = vpop.f32.mrf.mxu0
          %v1415 = vadd.f32 %v1396, %v1414
          %v1416 = vpop.f32.mrf.mxu0
          %v1417 = vadd.f32 %v1398, %v1416
          %1418 = vdwg.mxu0
          %s1419 = smul.u32 %s29, 16
          %s1420 = smul.addr %s1419, 8
          %s1421 = scalar_lea.vmem [#allocation2], %s1420
          %1422 = vst [vmem:[%s1421] sm:$0xff] %v1182
          %1423 = vst [vmem:[%s1421 + $0x8] sm:$0xff] %v1258
          %1424 = vst [vmem:[%s1421 + $0x10] sm:$0xff] %v1334
          %1425 = vst [vmem:[%s1421 + $0x18] sm:$0xff] %v1410
          %1426 = vst [vmem:[%s1421 + $0x20] sm:$0xff] %v1184
          %1427 = vst [vmem:[%s1421 + $0x28] sm:$0xff] %v1260
          %1428 = vst [vmem:[%s1421 + $0x30] sm:$0xff] %v1336
          %1429 = vst [vmem:[%s1421 + $0x38] sm:$0xff] %v1412
          %1430 = vst [vmem:[%s1421 + $0x40] sm:$0xff] %v1187
          %1431 = vst [vmem:[%s1421 + $0x48] sm:$0xff] %v1263
          %1432 = vst [vmem:[%s1421 + $0x50] sm:$0xff] %v1339
          %1433 = vst [vmem:[%s1421 + $0x58] sm:$0xff] %v1415
          %1434 = vst [vmem:[%s1421 + $0x60] sm:$0xff] %v1189
          %1435 = vst [vmem:[%s1421 + $0x68] sm:$0xff] %v1265
          %1436 = vst [vmem:[%s1421 + $0x70] sm:$0xff] %v1341
          %1437 = vst [vmem:[%s1421 + $0x78] sm:$0xff] %v1417
          %p1438 = scmp.eq.s32.totalorder %s29, 0
          // Predicated region
          $region61: #{tpu_custom_call.1} parent=59 // pred_check
            %p1439 = pneg %p1438
          $region62: #{tpu_custom_call.1} parent=59 // pred_check_branch
            %1441 = sbr.rel (%p1439) target = $region64
          $region63: #{tpu_custom_call.1} parent=59 // pred_region
            %1442 = vst [vmem:[#allocation3] sm:$0xff] 0.0
          $region64: #{tpu_custom_call.1} parent=59 // pred_fallthru
            _
          %v1443 = vld [vmem:[#allocation3] sm:$0xff]
          %v1444 = vadd.f32 %v1182, %v1184
          %v1445 = vadd.f32 %v1444, %v1187
          %v1446 = vadd.f32 %v1445, %v1189
          %v1447 = vrot.slane %v1446, 4
          %v1448 = vadd.f32 %v1446, %v1447
          %v1449 = vrot.slane %v1448, 2
          %v1450 = vadd.f32 %v1448, %v1449
          %v1451 = vrot.slane %v1450, 1
          %v1452 = vadd.f32 %v1450, %v1451
          %v1453 = vadd.f32 %v1258, %v1260
          %v1454 = vadd.f32 %v1453, %v1263
          %v1455 = vadd.f32 %v1454, %v1265
          %v1456 = vrot.slane %v1455, 4
          %v1457 = vadd.f32 %v1455, %v1456
          %v1458 = vrot.slane %v1457, 2
          %v1459 = vadd.f32 %v1457, %v1458
          %v1460 = vrot.slane %v1459, 1
          %v1461 = vadd.f32 %v1459, %v1460
          %v1462 = vadd.f32 %v1334, %v1336
          %v1463 = vadd.f32 %v1462, %v1339
          %v1464 = vadd.f32 %v1463, %v1341
          %v1465 = vrot.slane %v1464, 4
          %v1466 = vadd.f32 %v1464, %v1465
          %v1467 = vrot.slane %v1466, 2
          %v1468 = vadd.f32 %v1466, %v1467
          %v1469 = vrot.slane %v1468, 1
          %v1470 = vadd.f32 %v1468, %v1469
          %v1471 = vadd.f32 %v1410, %v1412
          %v1472 = vadd.f32 %v1471, %v1415
          %v1473 = vadd.f32 %v1472, %v1417
          %v1474 = vrot.slane %v1473, 4
          %v1475 = vadd.f32 %v1473, %v1474
          %v1476 = vrot.slane %v1475, 2
          %v1477 = vadd.f32 %v1475, %v1476
          %v1478 = vrot.slane %v1477, 1
          %v1479 = vadd.f32 %v1477, %v1478
          %v1480 = vmul.f32 %v1182, %v1182
          %v1481 = vmul.f32 %v1258, %v1258
          %v1482 = vmul.f32 %v1334, %v1334
          %v1483 = vmul.f32 %v1410, %v1410
          %v1484 = vmul.f32 %v1184, %v1184
          %v1485 = vmul.f32 %v1260, %v1260
          %v1486 = vmul.f32 %v1336, %v1336
          %v1487 = vmul.f32 %v1412, %v1412
          %v1488 = vmul.f32 %v1187, %v1187
          %v1489 = vmul.f32 %v1263, %v1263
          %v1490 = vmul.f32 %v1339, %v1339
          %v1491 = vmul.f32 %v1415, %v1415
          %v1492 = vmul.f32 %v1189, %v1189
          %v1493 = vmul.f32 %v1265, %v1265
          %v1494 = vmul.f32 %v1341, %v1341
          %v1495 = vmul.f32 %v1417, %v1417
          %v1496 = vadd.f32 %v1480, %v1484
          %v1497 = vadd.f32 %v1496, %v1488
          %v1498 = vadd.f32 %v1497, %v1492
          %v1499 = vrot.slane %v1498, 4
          %v1500 = vadd.f32 %v1498, %v1499
          %v1501 = vrot.slane %v1500, 2
          %v1502 = vadd.f32 %v1500, %v1501
          %v1503 = vrot.slane %v1502, 1
          %v1504 = vadd.f32 %v1502, %v1503
          %v1505 = vadd.f32 %v1481, %v1485
          %v1506 = vadd.f32 %v1505, %v1489
          %v1507 = vadd.f32 %v1506, %v1493
          %v1508 = vrot.slane %v1507, 4
          %v1509 = vadd.f32 %v1507, %v1508
          %v1510 = vrot.slane %v1509, 2
          %v1511 = vadd.f32 %v1509, %v1510
          %v1512 = vrot.slane %v1511, 1
          %v1513 = vadd.f32 %v1511, %v1512
          %v1514 = vadd.f32 %v1482, %v1486
          %v1515 = vadd.f32 %v1514, %v1490
          %v1516 = vadd.f32 %v1515, %v1494
          %v1517 = vrot.slane %v1516, 4
          %v1518 = vadd.f32 %v1516, %v1517
          %v1519 = vrot.slane %v1518, 2
          %v1520 = vadd.f32 %v1518, %v1519
          %v1521 = vrot.slane %v1520, 1
          %v1522 = vadd.f32 %v1520, %v1521
          %v1523 = vadd.f32 %v1483, %v1487
          %v1524 = vadd.f32 %v1523, %v1491
          %v1525 = vadd.f32 %v1524, %v1495
          %v1526 = vrot.slane %v1525, 4
          %v1527 = vadd.f32 %v1525, %v1526
          %v1528 = vrot.slane %v1527, 2
          %v1529 = vadd.f32 %v1527, %v1528
          %v1530 = vrot.slane %v1529, 1
          %v1531 = vadd.f32 %v1529, %v1530
          %vm1532 = vcmask 1040384
          %v1533 = vsel %vm1532, %v1452, %v1504
          %v1534 = vsel %vm1532, %v1461, %v1513
          %v1535 = vsel %vm1532, %v1470, %v1522
          %v1536 = vsel %vm1532, %v1479, %v1531
          %v1541 = vrot.slane %v1534, 6
          %v1542 = vrot.slane %v1535, 4
          %v1543 = vrot.slane %v1536, 2
          %vm1544 = vcmask 1041408
          %v1545 = vsel %vm1544, %v1533, %v1541
          %vm1546 = vcmask 1045508
          %v1547 = vsel %vm1546, %v1542, %v1543
          %vm1548 = vcmask 1043456
          %v1549 = vsel %vm1548, %v1545, %v1547
          %v1551 = vadd.f32 %v1443, %v1549
          %1552 = vst [vmem:[#allocation3] sm:$0xff] %v1551
        $region60: #{tpu_custom_call.1} parent=39 // pred_fallthru
          _
        %p1553 = scmp.eq.s32.totalorder %s28, 1
        // Predicated region
        $region65: #{tpu_custom_call.1} parent=39 // pred_check
          %p1554 = pneg %p1553
        $region66: #{tpu_custom_call.1} parent=39 // pred_check_branch
          %1556 = sbr.rel (%p1554) target = $region68
        $region67: #{tpu_custom_call.1} parent=39 // pred_region
          %p1557 = scmp.eq.s32.totalorder %s29, 0
          // Predicated region
          $region69: #{tpu_custom_call.1} parent=67 // pred_check
            %p1558 = pneg %p1557
          $region70: #{tpu_custom_call.1} parent=67 // pred_check_branch
            %1560 = sbr.rel (%p1558) target = $region72
          $region71: #{tpu_custom_call.1} parent=67 // pred_region
            %v1561 = vld [vmem:[#allocation3] ss:$2 sm:$0xf]
            %v1562 = vmul.f32 %v1561, 0.015625
            %s1563 = scalar_lea.vmem [#allocation3], 1
            %v1564 = vld [vmem:[%s1563] ss:$2 sm:$0xf]
            %v1565 = vmul.f32 %v1564, 0.015625
            %v1566 = vmul.f32 %v1562, %v1562
            %v1567 = vsub.f32 %v1565, %v1566
            %v1568 = vmax.f32 %v1567, 0.0
            %v1569 = vld [vmem:[#allocation10] ss:$2 sm:$0xf]
            %v1570 = vadd.f32 %v1568, 1e-05
            %v1571 = vrsqrt.pop %v1570
            %v1572 = vmul.f32 %v1571, %v1570
            %v1573 = vmul.f32 %v1572, %v1571
            %v1574 = vmul.f32 0.5, %v1573
            %v1575 = vsub.f32 1.5, %v1574
            %v1576 = vmul.f32 %v1571, %v1575
            %vm1577 = vweird.f32 %v1570
            %vm1578 = vweird.f32 %v1571
            %vm1579 = vmor %vm1577, %vm1578
            %v1580 = vsel %vm1579, %v1571, %v1576
            %v1581 = vmul.f32 %v1569, %v1580
            %s1582 = scalar_lea.vmem [#allocation10], 1
            %v1583 = vld [vmem:[%s1582] ss:$2 sm:$0xf]
            %v1584 = vmul.f32 %v1562, %v1581
            %v1585 = vsub.f32 %v1583, %v1584
            %v1587 = vperm.slane %v1581, 0
            %v1588 = vperm.slane %v1581, 1
            %v1589 = vperm.slane %v1581, 2
            %v1590 = vperm.slane %v1581, 3
            %v1596 = vperm.slane %v1585, 0
            %v1597 = vperm.slane %v1585, 1
            %v1598 = vperm.slane %v1585, 2
            %v1599 = vperm.slane %v1585, 3
            %vm1604 = vcmask 1040384
            %v1605 = vsel %vm1604, %v1587, %v1596
            %v1606 = vsel %vm1604, %v1588, %v1597
            %v1607 = vsel %vm1604, %v1589, %v1598
            %v1608 = vsel %vm1604, %v1590, %v1599
            %v1613 = vrot.slane %v1606, 6
            %v1614 = vrot.slane %v1607, 4
            %v1615 = vrot.slane %v1608, 2
            %vm1616 = vcmask 1041408
            %v1617 = vsel %vm1616, %v1605, %v1613
            %vm1618 = vcmask 1045508
            %v1619 = vsel %vm1618, %v1614, %v1615
            %vm1620 = vcmask 1043456
            %v1621 = vsel %vm1620, %v1617, %v1619
            %1623 = vst [vmem:[#allocation4] sm:$0xff] %v1621
          $region72: #{tpu_custom_call.1} parent=67 // pred_fallthru
            _
          %s1624 = smul.u32 %s29, 16
          %s1625 = smul.addr %s1624, 8
          %s1626 = scalar_lea.vmem [#allocation2], %s1625
          %v1627 = vld [vmem:[%s1626] sm:$0xff]
          %v1628 = vld [vmem:[%s1626 + $0x8] sm:$0xff]
          %v1629 = vld [vmem:[%s1626 + $0x10] sm:$0xff]
          %v1630 = vld [vmem:[%s1626 + $0x18] sm:$0xff]
          %v1631 = vld [vmem:[%s1626 + $0x20] sm:$0xff]
          %v1632 = vld [vmem:[%s1626 + $0x28] sm:$0xff]
          %v1633 = vld [vmem:[%s1626 + $0x30] sm:$0xff]
          %v1634 = vld [vmem:[%s1626 + $0x38] sm:$0xff]
          %v1635 = vld [vmem:[%s1626 + $0x40] sm:$0xff]
          %v1636 = vld [vmem:[%s1626 + $0x48] sm:$0xff]
          %v1637 = vld [vmem:[%s1626 + $0x50] sm:$0xff]
          %v1638 = vld [vmem:[%s1626 + $0x58] sm:$0xff]
          %v1639 = vld [vmem:[%s1626 + $0x60] sm:$0xff]
          %v1640 = vld [vmem:[%s1626 + $0x68] sm:$0xff]
          %v1641 = vld [vmem:[%s1626 + $0x70] sm:$0xff]
          %v1642 = vld [vmem:[%s1626 + $0x78] sm:$0xff]
          %v1643 = vld [vmem:[#allocation4] ss:$2 sm:$0xf]
          %v1645 = vperm.slane %v1643, 0
          %v1646 = vperm.slane %v1643, 1
          %v1647 = vperm.slane %v1643, 2
          %v1648 = vperm.slane %v1643, 3
          %v1653 = vmul.f32 %v1627, %v1645
          %v1654 = vmul.f32 %v1628, %v1646
          %v1655 = vmul.f32 %v1629, %v1647
          %v1656 = vmul.f32 %v1630, %v1648
          %v1657 = vmul.f32 %v1631, %v1645
          %v1658 = vmul.f32 %v1632, %v1646
          %v1659 = vmul.f32 %v1633, %v1647
          %v1660 = vmul.f32 %v1634, %v1648
          %v1661 = vmul.f32 %v1635, %v1645
          %v1662 = vmul.f32 %v1636, %v1646
          %v1663 = vmul.f32 %v1637, %v1647
          %v1664 = vmul.f32 %v1638, %v1648
          %v1665 = vmul.f32 %v1639, %v1645
          %v1666 = vmul.f32 %v1640, %v1646
          %v1667 = vmul.f32 %v1641, %v1647
          %v1668 = vmul.f32 %v1642, %v1648
          %s1669 = scalar_lea.vmem [#allocation4], 1
          %v1670 = vld [vmem:[%s1669] ss:$2 sm:$0xf]
          %v1672 = vperm.slane %v1670, 0
          %v1673 = vperm.slane %v1670, 1
          %v1674 = vperm.slane %v1670, 2
          %v1675 = vperm.slane %v1670, 3
          %v1680 = vadd.f32 %v1653, %v1672
          %v1681 = vadd.f32 %v1654, %v1673
          %v1682 = vadd.f32 %v1655, %v1674
          %v1683 = vadd.f32 %v1656, %v1675
          %v1684 = vadd.f32 %v1657, %v1672
          %v1685 = vadd.f32 %v1658, %v1673
          %v1686 = vadd.f32 %v1659, %v1674
          %v1687 = vadd.f32 %v1660, %v1675
          %v1688 = vadd.f32 %v1661, %v1672
          %v1689 = vadd.f32 %v1662, %v1673
          %v1690 = vadd.f32 %v1663, %v1674
          %v1691 = vadd.f32 %v1664, %v1675
          %v1692 = vadd.f32 %v1665, %v1672
          %v1693 = vadd.f32 %v1666, %v1673
          %v1694 = vadd.f32 %v1667, %v1674
          %v1695 = vadd.f32 %v1668, %v1675
          %v1696 = vmax.f32 %v1680, 0.0
          %v1697 = vmax.f32 %v1681, 0.0
          %v1698 = vmax.f32 %v1682, 0.0
          %v1699 = vmax.f32 %v1683, 0.0
          %v1700 = vmax.f32 %v1684, 0.0
          %v1701 = vmax.f32 %v1685, 0.0
          %v1702 = vmax.f32 %v1686, 0.0
          %v1703 = vmax.f32 %v1687, 0.0
          %v1704 = vmax.f32 %v1688, 0.0
          %v1705 = vmax.f32 %v1689, 0.0
          %v1706 = vmax.f32 %v1690, 0.0
          %v1707 = vmax.f32 %v1691, 0.0
          %v1708 = vmax.f32 %v1692, 0.0
          %v1709 = vmax.f32 %v1693, 0.0
          %v1710 = vmax.f32 %v1694, 0.0
          %v1711 = vmax.f32 %v1695, 0.0
          %v1712 = vpack.c.bf16 %v1700, %v1696
          %v1713 = vpack.c.bf16 %v1701, %v1697
          %v1714 = vpack.c.bf16 %v1702, %v1698
          %v1715 = vpack.c.bf16 %v1703, %v1699
          %v1716 = vpack.c.bf16 %v1708, %v1704
          %v1717 = vpack.c.bf16 %v1709, %v1705
          %v1718 = vpack.c.bf16 %v1710, %v1706
          %v1719 = vpack.c.bf16 %v1711, %v1707
          %v1720 = vld [vmem:[#allocation11] sm:$0xf]
          %v1721 = vld [vmem:[#allocation11 + $0x4] sm:$0xf]
          %v1722 = vld [vmem:[#allocation11 + $0x8] sm:$0xf]
          %v1723 = vld [vmem:[#allocation11 + $0xc] sm:$0xf]
          %v1724 = vld [vmem:[#allocation11 + $0x10] sm:$0xf]
          %v1725 = vld [vmem:[#allocation11 + $0x14] sm:$0xf]
          %v1726 = vld [vmem:[#allocation11 + $0x18] sm:$0xf]
          %v1727 = vld [vmem:[#allocation11 + $0x1c] sm:$0xf]
          %v1728 = vld [vmem:[#allocation11 + $0x20] sm:$0xf]
          %v1729 = vld [vmem:[#allocation11 + $0x24] sm:$0xf]
          %v1730 = vld [vmem:[#allocation11 + $0x28] sm:$0xf]
          %v1731 = vld [vmem:[#allocation11 + $0x2c] sm:$0xf]
          %v1732 = vld [vmem:[#allocation11 + $0x30] sm:$0xf]
          %v1733 = vld [vmem:[#allocation11 + $0x34] sm:$0xf]
          %v1734 = vld [vmem:[#allocation11 + $0x38] sm:$0xf]
          %v1735 = vld [vmem:[#allocation11 + $0x3c] sm:$0xf]
          %v1736 = vld [vmem:[#allocation11 + $0x40] sm:$0xf]
          %v1737 = vld [vmem:[#allocation11 + $0x44] sm:$0xf]
          %v1738 = vld [vmem:[#allocation11 + $0x48] sm:$0xf]
          %v1739 = vld [vmem:[#allocation11 + $0x4c] sm:$0xf]
          %v1740 = vld [vmem:[#allocation11 + $0x50] sm:$0xf]
          %v1741 = vld [vmem:[#allocation11 + $0x54] sm:$0xf]
          %v1742 = vld [vmem:[#allocation11 + $0x58] sm:$0xf]
          %v1743 = vld [vmem:[#allocation11 + $0x5c] sm:$0xf]
          %v1744 = vld [vmem:[#allocation11 + $0x60] sm:$0xf]
          %v1745 = vld [vmem:[#allocation11 + $0x64] sm:$0xf]
          %v1746 = vld [vmem:[#allocation11 + $0x68] sm:$0xf]
          %v1747 = vld [vmem:[#allocation11 + $0x6c] sm:$0xf]
          %v1748 = vld [vmem:[#allocation11 + $0x70] sm:$0xf]
          %v1749 = vld [vmem:[#allocation11 + $0x74] sm:$0xf]
          %v1750 = vld [vmem:[#allocation11 + $0x78] sm:$0xf]
          %v1751 = vld [vmem:[#allocation11 + $0x7c] sm:$0xf]
          %v1752 = vld [vmem:[#allocation11 + $0x80] sm:$0xf]
          %v1753 = vld [vmem:[#allocation11 + $0x84] sm:$0xf]
          %v1754 = vld [vmem:[#allocation11 + $0x88] sm:$0xf]
          %v1755 = vld [vmem:[#allocation11 + $0x8c] sm:$0xf]
          %v1756 = vld [vmem:[#allocation11 + $0x90] sm:$0xf]
          %v1757 = vld [vmem:[#allocation11 + $0x94] sm:$0xf]
          %v1758 = vld [vmem:[#allocation11 + $0x98] sm:$0xf]
          %v1759 = vld [vmem:[#allocation11 + $0x9c] sm:$0xf]
          %v1760 = vld [vmem:[#allocation11 + $0xa0] sm:$0xf]
          %v1761 = vld [vmem:[#allocation11 + $0xa4] sm:$0xf]
          %v1762 = vld [vmem:[#allocation11 + $0xa8] sm:$0xf]
          %v1763 = vld [vmem:[#allocation11 + $0xac] sm:$0xf]
          %v1764 = vld [vmem:[#allocation11 + $0xb0] sm:$0xf]
          %v1765 = vld [vmem:[#allocation11 + $0xb4] sm:$0xf]
          %v1766 = vld [vmem:[#allocation11 + $0xb8] sm:$0xf]
          %v1767 = vld [vmem:[#allocation11 + $0xbc] sm:$0xf]
          %v1768 = vld [vmem:[#allocation11 + $0xc0] sm:$0xf]
          %v1769 = vld [vmem:[#allocation11 + $0xc4] sm:$0xf]
          %v1770 = vld [vmem:[#allocation11 + $0xc8] sm:$0xf]
          %v1771 = vld [vmem:[#allocation11 + $0xcc] sm:$0xf]
          %v1772 = vld [vmem:[#allocation11 + $0xd0] sm:$0xf]
          %v1773 = vld [vmem:[#allocation11 + $0xd4] sm:$0xf]
          %v1774 = vld [vmem:[#allocation11 + $0xd8] sm:$0xf]
          %v1775 = vld [vmem:[#allocation11 + $0xdc] sm:$0xf]
          %v1776 = vld [vmem:[#allocation11 + $0xe0] sm:$0xf]
          %v1777 = vld [vmem:[#allocation11 + $0xe4] sm:$0xf]
          %v1778 = vld [vmem:[#allocation11 + $0xe8] sm:$0xf]
          %v1779 = vld [vmem:[#allocation11 + $0xec] sm:$0xf]
          %v1780 = vld [vmem:[#allocation11 + $0xf0] sm:$0xf]
          %v1781 = vld [vmem:[#allocation11 + $0xf4] sm:$0xf]
          %v1782 = vld [vmem:[#allocation11 + $0xf8] sm:$0xf]
          %v1783 = vld [vmem:[#allocation11 + $0xfc] sm:$0xf]
          %v1784 = vld [vmem:[%s4] sm:$0x1]
          %v1786 = vperm.slane %v1784, 0
          %v1852 = vunpack.c.l.b16 %v1720
          %v1853 = vunpack.c.l.b16 %v1721
          %v1854 = vunpack.c.l.b16 %v1722
          %v1855 = vunpack.c.l.b16 %v1723
          %v1856 = vunpack.c.l.b16 %v1724
          %v1857 = vunpack.c.l.b16 %v1725
          %v1858 = vunpack.c.l.b16 %v1726
          %v1859 = vunpack.c.l.b16 %v1727
          %v1860 = vunpack.c.l.b16 %v1728
          %v1861 = vunpack.c.l.b16 %v1729
          %v1862 = vunpack.c.l.b16 %v1730
          %v1863 = vunpack.c.l.b16 %v1731
          %v1864 = vunpack.c.l.b16 %v1732
          %v1865 = vunpack.c.l.b16 %v1733
          %v1866 = vunpack.c.l.b16 %v1734
          %v1867 = vunpack.c.l.b16 %v1735
          %v1868 = vunpack.c.l.b16 %v1736
          %v1869 = vunpack.c.l.b16 %v1737
          %v1870 = vunpack.c.l.b16 %v1738
          %v1871 = vunpack.c.l.b16 %v1739
          %v1872 = vunpack.c.l.b16 %v1740
          %v1873 = vunpack.c.l.b16 %v1741
          %v1874 = vunpack.c.l.b16 %v1742
          %v1875 = vunpack.c.l.b16 %v1743
          %v1876 = vunpack.c.l.b16 %v1744
          %v1877 = vunpack.c.l.b16 %v1745
          %v1878 = vunpack.c.l.b16 %v1746
          %v1879 = vunpack.c.l.b16 %v1747
          %v1880 = vunpack.c.l.b16 %v1748
          %v1881 = vunpack.c.l.b16 %v1749
          %v1882 = vunpack.c.l.b16 %v1750
          %v1883 = vunpack.c.l.b16 %v1751
          %v1884 = vunpack.c.l.b16 %v1752
          %v1885 = vunpack.c.l.b16 %v1753
          %v1886 = vunpack.c.l.b16 %v1754
          %v1887 = vunpack.c.l.b16 %v1755
          %v1888 = vunpack.c.l.b16 %v1756
          %v1889 = vunpack.c.l.b16 %v1757
          %v1890 = vunpack.c.l.b16 %v1758
          %v1891 = vunpack.c.l.b16 %v1759
          %v1892 = vunpack.c.l.b16 %v1760
          %v1893 = vunpack.c.l.b16 %v1761
          %v1894 = vunpack.c.l.b16 %v1762
          %v1895 = vunpack.c.l.b16 %v1763
          %v1896 = vunpack.c.l.b16 %v1764
          %v1897 = vunpack.c.l.b16 %v1765
          %v1898 = vunpack.c.l.b16 %v1766
          %v1899 = vunpack.c.l.b16 %v1767
          %v1900 = vunpack.c.l.b16 %v1768
          %v1901 = vunpack.c.l.b16 %v1769
          %v1902 = vunpack.c.l.b16 %v1770
          %v1903 = vunpack.c.l.b16 %v1771
          %v1904 = vunpack.c.l.b16 %v1772
          %v1905 = vunpack.c.l.b16 %v1773
          %v1906 = vunpack.c.l.b16 %v1774
          %v1907 = vunpack.c.l.b16 %v1775
          %v1908 = vunpack.c.l.b16 %v1776
          %v1909 = vunpack.c.l.b16 %v1777
          %v1910 = vunpack.c.l.b16 %v1778
          %v1911 = vunpack.c.l.b16 %v1779
          %v1912 = vunpack.c.l.b16 %v1780
          %v1913 = vunpack.c.l.b16 %v1781
          %v1914 = vunpack.c.l.b16 %v1782
          %v1915 = vunpack.c.l.b16 %v1783
          %v1916 = vpack.c.b16 %v1853, %v1852
          %v1917 = vpack.c.b16 %v1855, %v1854
          %v1918 = vpack.c.b16 %v1857, %v1856
          %v1919 = vpack.c.b16 %v1859, %v1858
          %v1920 = vpack.c.b16 %v1861, %v1860
          %v1921 = vpack.c.b16 %v1863, %v1862
          %v1922 = vpack.c.b16 %v1865, %v1864
          %v1923 = vpack.c.b16 %v1867, %v1866
          %v1924 = vpack.c.b16 %v1869, %v1868
          %v1925 = vpack.c.b16 %v1871, %v1870
          %v1926 = vpack.c.b16 %v1873, %v1872
          %v1927 = vpack.c.b16 %v1875, %v1874
          %v1928 = vpack.c.b16 %v1877, %v1876
          %v1929 = vpack.c.b16 %v1879, %v1878
          %v1930 = vpack.c.b16 %v1881, %v1880
          %v1931 = vpack.c.b16 %v1883, %v1882
          %v1932 = vpack.c.b16 %v1885, %v1884
          %v1933 = vpack.c.b16 %v1887, %v1886
          %v1934 = vpack.c.b16 %v1889, %v1888
          %v1935 = vpack.c.b16 %v1891, %v1890
          %v1936 = vpack.c.b16 %v1893, %v1892
          %v1937 = vpack.c.b16 %v1895, %v1894
          %v1938 = vpack.c.b16 %v1897, %v1896
          %v1939 = vpack.c.b16 %v1899, %v1898
          %v1940 = vpack.c.b16 %v1901, %v1900
          %v1941 = vpack.c.b16 %v1903, %v1902
          %v1942 = vpack.c.b16 %v1905, %v1904
          %v1943 = vpack.c.b16 %v1907, %v1906
          %v1944 = vpack.c.b16 %v1909, %v1908
          %v1945 = vpack.c.b16 %v1911, %v1910
          %v1946 = vpack.c.b16 %v1913, %v1912
          %v1947 = vpack.c.b16 %v1915, %v1914
          %1980 = vmatpush.bf16.msra.mxu0 %v1923
          %1981 = vmatpush.bf16.msra.mxu0 %v1922
          %1982 = vmatpush.bf16.msra.mxu0 %v1921
          %1983 = vmatpush.bf16.msra.mxu0 %v1920
          %1984 = vmatpush.bf16.msra.mxu0 %v1919
          %1985 = vmatpush.bf16.msra.mxu0 %v1918
          %1986 = vmatpush.bf16.msra.mxu0 %v1917
          %1987 = vmatpush.bf16.msra.mxu0 %v1916
          %1988 = vmatmul.bf16.gmra.mxu0 %v1712
          %v1989 = vpop.f32.mrf.mxu0
          %v1990 = vadd.f32 %v1786, %v1989
          %v1991 = vpop.f32.mrf.mxu0
          %v1992 = vadd.f32 %v1786, %v1991
          %1993 = vmatmul.bf16.gmra.mxu0 %v1716
          %v1994 = vpop.f32.mrf.mxu0
          %v1995 = vadd.f32 %v1786, %v1994
          %v1996 = vpop.f32.mrf.mxu0
          %v1997 = vadd.f32 %v1786, %v1996
          %1998 = vdwg.mxu0
          %1999 = vmatpush.bf16.msra.mxu0 %v1931
          %2000 = vmatpush.bf16.msra.mxu0 %v1930
          %2001 = vmatpush.bf16.msra.mxu0 %v1929
          %2002 = vmatpush.bf16.msra.mxu0 %v1928
          %2003 = vmatpush.bf16.msra.mxu0 %v1927
          %2004 = vmatpush.bf16.msra.mxu0 %v1926
          %2005 = vmatpush.bf16.msra.mxu0 %v1925
          %2006 = vmatpush.bf16.msra.mxu0 %v1924
          %2007 = vmatmul.bf16.gmra.mxu0 %v1713
          %v2008 = vpop.f32.mrf.mxu0
          %v2009 = vadd.f32 %v1990, %v2008
          %v2010 = vpop.f32.mrf.mxu0
          %v2011 = vadd.f32 %v1992, %v2010
          %2012 = vmatmul.bf16.gmra.mxu0 %v1717
          %v2013 = vpop.f32.mrf.mxu0
          %v2014 = vadd.f32 %v1995, %v2013
          %v2015 = vpop.f32.mrf.mxu0
          %v2016 = vadd.f32 %v1997, %v2015
          %2017 = vdwg.mxu0
          %2018 = vmatpush.bf16.msra.mxu0 %v1939
          %2019 = vmatpush.bf16.msra.mxu0 %v1938
          %2020 = vmatpush.bf16.msra.mxu0 %v1937
          %2021 = vmatpush.bf16.msra.mxu0 %v1936
          %2022 = vmatpush.bf16.msra.mxu0 %v1935
          %2023 = vmatpush.bf16.msra.mxu0 %v1934
          %2024 = vmatpush.bf16.msra.mxu0 %v1933
          %2025 = vmatpush.bf16.msra.mxu0 %v1932
          %2026 = vmatmul.bf16.gmra.mxu0 %v1714
          %v2027 = vpop.f32.mrf.mxu0
          %v2028 = vadd.f32 %v2009, %v2027
          %v2029 = vpop.f32.mrf.mxu0
          %v2030 = vadd.f32 %v2011, %v2029
          %2031 = vmatmul.bf16.gmra.mxu0 %v1718
          %v2032 = vpop.f32.mrf.mxu0
          %v2033 = vadd.f32 %v2014, %v2032
          %v2034 = vpop.f32.mrf.mxu0
          %v2035 = vadd.f32 %v2016, %v2034
          %2036 = vdwg.mxu0
          %2037 = vmatpush.bf16.msra.mxu0 %v1947
          %2038 = vmatpush.bf16.msra.mxu0 %v1946
          %2039 = vmatpush.bf16.msra.mxu0 %v1945
          %2040 = vmatpush.bf16.msra.mxu0 %v1944
          %2041 = vmatpush.bf16.msra.mxu0 %v1943
          %2042 = vmatpush.bf16.msra.mxu0 %v1942
          %2043 = vmatpush.bf16.msra.mxu0 %v1941
          %2044 = vmatpush.bf16.msra.mxu0 %v1940
          %2045 = vmatmul.bf16.gmra.mxu0 %v1715
          %v2046 = vpop.f32.mrf.mxu0
          %v2047 = vadd.f32 %v2028, %v2046
          %v2048 = vpop.f32.mrf.mxu0
          %v2049 = vadd.f32 %v2030, %v2048
          %2050 = vmatmul.bf16.gmra.mxu0 %v1719
          %v2051 = vpop.f32.mrf.mxu0
          %v2052 = vadd.f32 %v2033, %v2051
          %v2053 = vpop.f32.mrf.mxu0
          %v2054 = vadd.f32 %v2035, %v2053
          %2055 = vdwg.mxu0
          %2056 = vst [vmem:[%s313] sm:$0xff] %v2047
          %2057 = vst [vmem:[%s313 + $0x8] sm:$0xff] %v2049
          %2058 = vst [vmem:[%s313 + $0x10] sm:$0xff] %v2052
          %2059 = vst [vmem:[%s313 + $0x18] sm:$0xff] %v2054
        $region68: #{tpu_custom_call.1} parent=39 // pred_fallthru
          _
        %s2060 = sand.u32 %s160, 1
        %s2061 = scalar_lea.sflag [#allocation7], %s2060
        %s2062 = sand.u32 %s160, 1
        %s2063 = smul.addr %s2062, 32
        %s2064 = scalar_lea.vmem [#allocation13], %s2063
        // Predicated region
        $region73: #{tpu_custom_call.1} parent=39 // pred_check
          %p2065 = pneg %p170
        $region74: #{tpu_custom_call.1} parent=39 // pred_check_branch
          %2067 = sbr.rel (%p2065) target = $region76
        $region75: #{tpu_custom_call.1} parent=39 // pred_region
          %s2068 = smul.u32 %s29, %s28
          %s2069 = smul.u32 4, %s2068
          %2071 = vsyncadd %s2061, 0
          %s2072 = smul.addr %s2069, 8
          %s2073 = scalar_lea.hbm %s5, %s2072
          %s2074 = sshll.u32 %s2064, 4
          %s2075 = int_to_ptr.vmem [resolvable:$true] %s2074
          %s2076 = sshll.u32 %s2073, 4
          %s2077 = int_to_ptr.hbm [resolvable:$true] %s2076
          %2082 = dma.vmem_to_hbm [thread:$0]  %s2075, 512, %s2077, %s2061, 128, 128, 8
        $region76: #{tpu_custom_call.1} parent=39 // pred_fallthru
          _
      $region40: #{tpu_custom_call.1} parent=5 // pred_fallthru
        _
      %p2083 = scmp.le.s32.totalorder 2, %s19
      // Predicated region
      $region77: #{tpu_custom_call.1} parent=5 // pred_check
        %p2084 = pneg %p2083
      $region78: #{tpu_custom_call.1} parent=5 // pred_check_branch
        %2086 = sbr.rel (%p2084) target = $region80
      $region79: #{tpu_custom_call.1} parent=5 // pred_region
        %s2087 = ssub.s32 %s19, 2
        // Predicated region
        $region81: #{tpu_custom_call.1} parent=79 // pred_check
          %p2088 = pneg %p176
        $region82: #{tpu_custom_call.1} parent=79 // pred_check_branch
          %2090 = sbr.rel (%p2088) target = $region84
        $region83: #{tpu_custom_call.1} parent=79 // pred_region
          %s2091 = sand.u32 %s161, 1
          %s2092 = scalar_lea.sflag [#allocation7], %s2091
          %s2093 = sand.u32 %s161, 1
          %s2094 = smul.addr %s2093, 32
          %s2095 = scalar_lea.vmem [#allocation13], %s2094
          %2097 = dma.done %s2092, 512
        $region84: #{tpu_custom_call.1} parent=79 // pred_fallthru
          _
      $region80: #{tpu_custom_call.1} parent=5 // pred_fallthru
        _
    $region6: #{tpu_custom_call.1} parent=1 // loop_footer
      %s23 = sadd.s32 1, %s19
    $region7: #{tpu_custom_call.1} parent=1 // loop_footer_branch
      %18 = sbr.rel target = $region3
    $region8: #{tpu_custom_call.1} parent=1 // loop_exit
      _
    %2098 = vsyncpa [#allocation6], 1
    %s2099 = scalar_lea.sflag [#allocation6], 1
    %2100 = vsyncpa %s2099, 1
    %2101 = vsyncpa [#allocation9], 1
    %2102 = vsyncpa [#allocation12], 1
    %2103 = vsyncpa [#allocation7], 1
    %s2104 = scalar_lea.sflag [#allocation7], 1
    %2105 = vsyncpa %s2104, 1

</llo_original>
